<compile_context>
chip_gen: v6e
topology: v6e:2x2x1
jax: 0.10.0
libtpu: 0.0.40
codegen_flags: <defaults>
</compile_context>

<pallas_src>
import jax
import jax.numpy as jnp
from jax import lax
from jax.experimental import pallas as pl
from jax.experimental.pallas import tpu as pltpu


def _rope_attention_kernel(sin_ref, cos_ref, rot_ref, x_ref,
                           wq_ref, wk_ref, wv_ref, wo_ref,
                           o_ref, acc_ref):
    """One (batch element, head) grid step.

    Shapes (all 2-D so every dot lowers to a plain MXU matmul):
      x_ref          (N, D)    operand dtype (f32 or bf16)
      wq/wk/wv_ref   (dh, D)   PyTorch (out, in) weight rows for this head
      wo_ref         (dh, D)   rows of W_out^T for this head
      sin/cos_ref    (N, dh)   f32 interleaved-pair RoPE tables (resident)
      rot_ref        (dh, dh)  f32 signed pair-swap matrix (q @ rot == swap_first_two(q))
      o_ref          (N, D)    written once, at the last head
      acc_ref        (N, D)    f32 accumulator over heads (scratch)
    """
    h = pl.program_id(1)
    dh = wq_ref.shape[0]
    scale = dh ** -0.5

    x = x_ref[...]
    op_dt = x.dtype
    # y = x @ W^T: contract dim 1 of both operands so the PyTorch (out, in)
    # weight layout feeds the MXU without any transpose.
    dn_in = (((1,), (1,)), ((), ()))

    q = lax.dot_general(x, wq_ref[...], dn_in, preferred_element_type=jnp.float32)
    k = lax.dot_general(x, wk_ref[...], dn_in, preferred_element_type=jnp.float32)
    v = lax.dot_general(x, wv_ref[...], dn_in, preferred_element_type=jnp.float32)

    # --- Axial1DRoPE (interleaved pairs), in f32.  1/sqrt(dh) is folded into
    # q before the (linear) rotation, so it never touches the (N, N) scores.
    sin = sin_ref[...]
    cos = cos_ref[...]
    rot = rot_ref[...]
    q = q * scale
    q = q * cos + jnp.dot(q, rot, preferred_element_type=jnp.float32) * sin
    k = k * cos + jnp.dot(k, rot, preferred_element_type=jnp.float32) * sin

    # --- attention scores + numerically stable softmax, kept in f32.
    dots = lax.dot_general(q.astype(op_dt), k.astype(op_dt),
                           (((1,), (1,)), ((), ())),
                           preferred_element_type=jnp.float32)          # (N, N)
    dots = dots - jnp.max(dots, axis=-1, keepdims=True)
    p = jnp.exp(dots)
    p = p * pl.reciprocal(jnp.sum(p, axis=-1, keepdims=True), approx=True)

    out_h = jnp.dot(p.astype(op_dt), v.astype(op_dt),
                    preferred_element_type=jnp.float32)                 # (N, dh)

    # This head's slice of the output projection: out_h @ W_out[:, h*dh:(h+1)*dh]^T
    contrib = jnp.dot(out_h.astype(op_dt), wo_ref[...],
                      preferred_element_type=jnp.float32)               # (N, D)

    @pl.when(h == 0)
    def _():
        acc_ref[...] = jnp.zeros_like(acc_ref)

    acc_ref[...] += contrib

    @pl.when(h == pl.num_programs(1) - 1)
    def _():
        o_ref[...] = acc_ref[...].astype(o_ref.dtype)


def rope_attention_forward(x, w_qkv, w_out, *, heads, dim_head,
                           compute_dtype=jnp.bfloat16):
    """Fused Axial1DRoPE + Attention forward (project_out=True path).

    x:      (B, N, D)
    w_qkv:  (3*heads*dim_head, D)  -- nn.Linear(dim, inner*3, bias=False).weight
    w_out:  (D, heads*dim_head)    -- nn.Linear(inner, dim).weight
    compute_dtype: MXU operand dtype (bf16 default for v6e/v7x rate and halved
      HBM/VMEM traffic).  RoPE, softmax and all accumulation stay f32.
      Pass None to keep operands in x.dtype.
    """
    B, N, D = x.shape
    inner = heads * dim_head
    assert w_qkv.shape == (3 * inner, D)
    assert w_out.shape == (D, inner)
    assert dim_head % 2 == 0, "RoPE needs an even head dim"
    assert dim_head % 8 == 0, "(8,128) sublane granularity for per-head weight tiles"

    out_dtype = x.dtype
    op_dtype = x.dtype if compute_dtype is None else compute_dtype

    # --- Axial1DRoPE tables, mirroring the PyTorch buffers / rearranges (f32).
    half = dim_head // 2
    inv_freq = 1.0 / (10000.0 ** (jnp.arange(0, dim_head, 2, dtype=jnp.float32) / dim_head))
    sinusoid = jnp.arange(N, dtype=jnp.float32)[:, None] * inv_freq[None, :]   # (N, dh/2)
    sin_rep = jnp.repeat(jnp.sin(sinusoid), 2, axis=-1)   # (N, dh) interleaved repeat
    cos_rep = jnp.repeat(jnp.cos(sinusoid), 2, axis=-1)

    # Signed pair-swap matrix: (t @ rot)[..., 2i] = -t[..., 2i+1],
    #                          (t @ rot)[..., 2i+1] =  t[..., 2i]
    i = jnp.arange(half)
    rot = jnp.zeros((dim_head, dim_head), jnp.float32)
    rot = rot.at[2 * i + 1, 2 * i].set(-1.0)
    rot = rot.at[2 * i, 2 * i + 1].set(1.0)

    # Operand-only dtype cast.  W_out is transposed once (weight-sized, one-off
    # XLA op) so each head's tile is a lane-dense (dh, D) BlockSpec block.
    x_op = x.astype(op_dtype)
    w_qkv_op = w_qkv.astype(op_dtype)
    w_out_t = jnp.transpose(w_out).astype(op_dtype)          # (inner, D)

    op_sz = jnp.dtype(op_dtype).itemsize
    out_sz = jnp.dtype(out_dtype).itemsize

    # Explicit VMEM budget for the per-step working set (pipeline buffers are
    # double-buffered); capped at v7x's 64 MiB physical VMEM.
    vmem_est = (
        2 * N * D * op_sz                                    # x block
        + 2 * N * D * out_sz                                 # o block
        + 2 * 4 * dim_head * D * op_sz                       # W_q/W_k/W_v/W_out^T tiles
        + 2 * (2 * N * dim_head + dim_head * dim_head) * 4   # sin/cos/rot
        + N * D * 4                                          # acc scratch
        + 2 * N * N * 4                                      # scores + probs
        + 4 * N * dim_head * 4                               # q, k, v, out_h
        + N * D * 4                                          # per-head projection contribution
    )
    vmem_limit = int(min(64 * 2**20, max(2 * vmem_est, 24 * 2**20)))

    flops = (2 * B * N * D * 3 * inner                       # QKV projection
             + 2 * 2 * B * heads * N * dim_head * dim_head   # RoPE pair-swap matmuls
             + 2 * 2 * B * heads * N * N * dim_head          # QK^T + P@V
             + 2 * B * N * inner * D)                        # output projection
    bytes_accessed = (B * N * D * (op_sz + out_sz)
                      + B * 4 * inner * D * op_sz
                      + (2 * N * dim_head + dim_head * dim_head) * 4)
    cost = pl.CostEstimate(flops=int(flops),
                           transcendentals=int(B * heads * N * N),
                           bytes_accessed=int(bytes_accessed))

    grid = (B, heads)   # b: "parallel" (megacore), h: "arbitrary" (output reduction)

    return pl.pallas_call(
        _rope_attention_kernel,
        out_shape=jax.ShapeDtypeStruct((B, N, D), out_dtype),
        grid_spec=pltpu.PrefetchScalarGridSpec(
            num_scalar_prefetch=0,
            grid=grid,
            in_specs=[
                pl.BlockSpec((N, dim_head), lambda b, h: (0, 0)),              # sin (resident)
                pl.BlockSpec((N, dim_head), lambda b, h: (0, 0)),              # cos (resident)
                pl.BlockSpec((dim_head, dim_head), lambda b, h: (0, 0)),       # rot (resident)
                pl.BlockSpec((None, N, D), lambda b, h: (b, 0, 0)),            # x (per batch)
                pl.BlockSpec((dim_head, D), lambda b, h: (h, 0)),              # W_q rows, head h
                pl.BlockSpec((dim_head, D), lambda b, h: (heads + h, 0)),      # W_k rows, head h
                pl.BlockSpec((dim_head, D), lambda b, h: (2 * heads + h, 0)),  # W_v rows, head h
                pl.BlockSpec((dim_head, D), lambda b, h: (h, 0)),              # W_out^T rows, head h
            ],
            out_specs=pl.BlockSpec((None, N, D), lambda b, h: (b, 0, 0)),
            scratch_shapes=[pltpu.VMEM((N, D), jnp.float32)],
        ),
        compiler_params=pltpu.CompilerParams(
            dimension_semantics=("parallel", "arbitrary"),
            vmem_limit_bytes=vmem_limit,
        ),
        cost_estimate=cost,
    )(sin_rep, cos_rep, rot, x_op, w_qkv_op, w_qkv_op, w_qkv_op, w_out_t)


def rope_attention_reference(x, w_qkv, w_out, *, heads, dim_head):
    """Pure-JAX mirror of Attention.forward with Axial1DRoPE.apply_rotary_pos_emb."""
    B, N, D = x.shape
    inner = heads * dim_head
    scale = dim_head ** -0.5

    qkv = jnp.einsum("bnd,od->bno", x, w_qkv)                 # (B, N, 3*inner)
    q, k, v = jnp.split(qkv, 3, axis=-1)

    def split_heads(t):
        return t.reshape(B, N, heads, dim_head).transpose(0, 2, 1, 3)

    q, k, v = map(split_heads, (q, k, v))

    inv_freq = 1.0 / (10000.0 ** (jnp.arange(0, dim_head, 2, dtype=jnp.float32) / dim_head))
    sinusoid = jnp.arange(N, dtype=jnp.float32)[:, None] * inv_freq[None, :]
    sin = jnp.repeat(jnp.sin(sinusoid), 2, axis=-1)           # (N, dh) interleaved
    cos = jnp.repeat(jnp.cos(sinusoid), 2, axis=-1)

    def swap_first_two(t):
        t2 = t.reshape(*t.shape[:-1], dim_head // 2, 2)
        s = jnp.stack([-t2[..., 1], t2[..., 0]], axis=-1)
        return s.reshape(t.shape)

    q = q * cos + swap_first_two(q) * sin
    k = k * cos + swap_first_two(k) * sin

    dots = jnp.einsum("bhid,bhjd->bhij", q, k) * scale
    attn = jax.nn.softmax(dots, axis=-1)
    out = jnp.einsum("bhij,bhjd->bhid", attn, v)
    out = out.transpose(0, 2, 1, 3).reshape(B, N, inner)
    return jnp.einsum("bni,di->bnd", out, w_out)


if __name__ == "__main__":
    # Small but lane-dense shapes: dim = 128 (multiple of 128 -> unmasked
    # stores), heads = 4, dim_head = 32, seq = 16, batch = 2.
    B, N, DIM = 2, 16, 128
    HEADS, DIM_HEAD = 4, 32
    INNER = HEADS * DIM_HEAD            # 128; project_out=True since heads != 1

    key = jax.random.PRNGKey(0)
    kx, kqkv, kout = jax.random.split(key, 3)
    x = jax.random.normal(kx, (B, N, DIM), dtype=jnp.float32)
    # PyTorch nn.Linear weight layout: (out_features, in_features)
    w_qkv = jax.random.normal(kqkv, (3 * INNER, DIM), dtype=jnp.float32) * 0.05
    w_out = jax.random.normal(kout, (DIM, INNER), dtype=jnp.float32) * 0.05

    ref = rope_attention_reference(x, w_qkv, w_out, heads=HEADS, dim_head=DIM_HEAD)

    # f32 operands: tight check (only deviation is the EUP approx reciprocal).
    out_f32 = jax.block_until_ready(
        rope_attention_forward(x, w_qkv, w_out, heads=HEADS, dim_head=DIM_HEAD,
                               compute_dtype=None))
    assert out_f32.shape == (B, N, DIM)
    assert jnp.allclose(out_f32, ref, atol=5e-3, rtol=5e-3), "f32 mismatch vs reference"

    # Default path: bf16 MXU operands (v6e/v7x fast path), f32 softmax/accum.
    out_bf16 = jax.block_until_ready(
        rope_attention_forward(x, w_qkv, w_out, heads=HEADS, dim_head=DIM_HEAD))
    assert out_bf16.shape == (B, N, DIM)
    assert jnp.allclose(out_bf16, ref, atol=2e-2, rtol=2e-2), "bf16 mismatch vs reference"

    print("KERNEL_OK")
</pallas_src>

<mosaic_0001>
module attributes {stable_mosaic.version = 11 : i64} {
  func.func @_rope_attention_kernel(%arg0: i32, %arg1: i32, %arg2: memref<16x32xf32, #tpu.memory_space<vmem>>, %arg3: memref<16x32xf32, #tpu.memory_space<vmem>>, %arg4: memref<32x32xf32, #tpu.memory_space<vmem>>, %arg5: memref<1x16x128xf32, #tpu.memory_space<vmem>>, %arg6: memref<32x128xf32, #tpu.memory_space<vmem>>, %arg7: memref<32x128xf32, #tpu.memory_space<vmem>>, %arg8: memref<32x128xf32, #tpu.memory_space<vmem>>, %arg9: memref<32x128xf32, #tpu.memory_space<vmem>>, %arg10: memref<1x16x128xf32, #tpu.memory_space<vmem>>, %arg11: memref<16x128xf32, #tpu.memory_space<vmem>>) attributes {dimension_semantics = [#tpu.dimension_semantics<parallel>, #tpu.dimension_semantics<arbitrary>], iteration_bounds = array<i64: 2, 4>, scalar_prefetch = 0 : i64, scratch_operands = 1 : i64, tpu.core_type = #tpu.core_type<tc>, window_params = [{pipeline_mode = #tpu.pipeline_mode<synchronous>, transform_indices = @transform_0, window_bounds = array<i64: 16, 32>}, {pipeline_mode = #tpu.pipeline_mode<synchronous>, transform_indices = @transform_1, window_bounds = array<i64: 16, 32>}, {pipeline_mode = #tpu.pipeline_mode<synchronous>, transform_indices = @transform_2, window_bounds = array<i64: 32, 32>}, {transform_indices = @transform_3, window_bounds = array<i64: 1, 16, 128>}, {transform_indices = @transform_4, window_bounds = array<i64: 32, 128>}, {transform_indices = @transform_5, window_bounds = array<i64: 32, 128>}, {transform_indices = @transform_6, window_bounds = array<i64: 32, 128>}, {transform_indices = @transform_7, window_bounds = array<i64: 32, 128>}, {transform_indices = @transform_8, window_bounds = array<i64: 1, 16, 128>}]} {
    %c0 = arith.constant 0 : index
    %c0_0 = arith.constant 0 : index
    %c0_1 = arith.constant 0 : index
    %0 = vector.load %arg5[%c0, %c0_0, %c0_1] : memref<1x16x128xf32, #tpu.memory_space<vmem>>, vector<1x16x128xf32>
    %1 = vector.shape_cast %0 : vector<1x16x128xf32> to vector<16x128xf32>
    %c0_2 = arith.constant 0 : index
    %c0_3 = arith.constant 0 : index
    %2 = vector.load %arg6[%c0_2, %c0_3] : memref<32x128xf32, #tpu.memory_space<vmem>>, vector<32x128xf32>
    %cst = arith.constant dense<0.000000e+00> : vector<16x32xf32>
    %3 = tpu.matmul %1, %2, %cst {dimension_numbers = #tpu.dot_dimension_numbers<[1], [1], [0], [0], [0, 0, 1, 0], [], []>} : vector<16x128xf32>, vector<32x128xf32>, vector<16x32xf32> -> vector<16x32xf32>
    %c0_4 = arith.constant 0 : index
    %c0_5 = arith.constant 0 : index
    %4 = vector.load %arg7[%c0_4, %c0_5] : memref<32x128xf32, #tpu.memory_space<vmem>>, vector<32x128xf32>
    %cst_6 = arith.constant dense<0.000000e+00> : vector<16x32xf32>
    %5 = tpu.matmul %1, %4, %cst_6 {dimension_numbers = #tpu.dot_dimension_numbers<[1], [1], [0], [0], [0, 0, 1, 0], [], []>} : vector<16x128xf32>, vector<32x128xf32>, vector<16x32xf32> -> vector<16x32xf32>
    %c0_7 = arith.constant 0 : index
    %c0_8 = arith.constant 0 : index
    %6 = vector.load %arg8[%c0_7, %c0_8] : memref<32x128xf32, #tpu.memory_space<vmem>>, vector<32x128xf32>
    %cst_9 = arith.constant dense<0.000000e+00> : vector<16x32xf32>
    %7 = tpu.matmul %1, %6, %cst_9 {dimension_numbers = #tpu.dot_dimension_numbers<[1], [1], [0], [0], [0, 0, 1, 0], [], []>} : vector<16x128xf32>, vector<32x128xf32>, vector<16x32xf32> -> vector<16x32xf32>
    %c0_10 = arith.constant 0 : index
    %c0_11 = arith.constant 0 : index
    %8 = vector.load %arg2[%c0_10, %c0_11] : memref<16x32xf32, #tpu.memory_space<vmem>>, vector<16x32xf32>
    %c0_12 = arith.constant 0 : index
    %c0_13 = arith.constant 0 : index
    %9 = vector.load %arg3[%c0_12, %c0_13] : memref<16x32xf32, #tpu.memory_space<vmem>>, vector<16x32xf32>
    %c0_14 = arith.constant 0 : index
    %c0_15 = arith.constant 0 : index
    %10 = vector.load %arg4[%c0_14, %c0_15] : memref<32x32xf32, #tpu.memory_space<vmem>>, vector<32x32xf32>
    %cst_16 = arith.constant 0.176776692 : f32
    %11 = vector.broadcast %cst_16 : f32 to vector<16x32xf32>
    %12 = arith.mulf %3, %11 : vector<16x32xf32>
    %13 = arith.mulf %12, %9 : vector<16x32xf32>
    %cst_17 = arith.constant dense<0.000000e+00> : vector<16x32xf32>
    %14 = tpu.matmul %12, %10, %cst_17 {dimension_numbers = #tpu.dot_dimension_numbers<[1], [0], [0], [1], [0, 0, 1, 1], [], []>} : vector<16x32xf32>, vector<32x32xf32>, vector<16x32xf32> -> vector<16x32xf32>
    %15 = arith.mulf %14, %8 : vector<16x32xf32>
    %16 = arith.addf %13, %15 : vector<16x32xf32>
    %17 = arith.mulf %5, %9 : vector<16x32xf32>
    %cst_18 = arith.constant dense<0.000000e+00> : vector<16x32xf32>
    %18 = tpu.matmul %5, %10, %cst_18 {dimension_numbers = #tpu.dot_dimension_numbers<[1], [0], [0], [1], [0, 0, 1, 1], [], []>} : vector<16x32xf32>, vector<32x32xf32>, vector<16x32xf32> -> vector<16x32xf32>
    %19 = arith.mulf %18, %8 : vector<16x32xf32>
    %20 = arith.addf %17, %19 : vector<16x32xf32>
    %cst_19 = arith.constant dense<0.000000e+00> : vector<16x16xf32>
    %21 = tpu.matmul %16, %20, %cst_19 {dimension_numbers = #tpu.dot_dimension_numbers<[1], [1], [0], [0], [0, 0, 1, 0], [], []>} : vector<16x32xf32>, vector<16x32xf32>, vector<16x16xf32> -> vector<16x16xf32>
    %cst_20 = arith.constant dense<0xFF800000> : vector<16xf32>
    %22 = vector.multi_reduction <maximumf>, %21, %cst_20 [1] : vector<16x16xf32> to vector<16xf32>
    %23 = vector.shape_cast %22 : vector<16xf32> to vector<16x1xf32>
    %24 = vector.broadcast %23 : vector<16x1xf32> to vector<16x16xf32>
    %25 = arith.subf %21, %24 : vector<16x16xf32>
    %26 = math.exp %25 : vector<16x16xf32>
    %cst_21 = arith.constant dense<0.000000e+00> : vector<16xf32>
    %27 = vector.multi_reduction <add>, %26, %cst_21 [1] : vector<16x16xf32> to vector<16xf32>
    %28 = vector.shape_cast %27 : vector<16xf32> to vector<16x1xf32>
    %29 = tpu.reciprocal %28 {approx = true} : vector<16x1xf32> -> vector<16x1xf32>
    %30 = vector.broadcast %29 : vector<16x1xf32> to vector<16x16xf32>
    %31 = arith.mulf %26, %30 : vector<16x16xf32>
    %cst_22 = arith.constant dense<0.000000e+00> : vector<16x32xf32>
    %32 = tpu.matmul %31, %7, %cst_22 {dimension_numbers = #tpu.dot_dimension_numbers<[1], [0], [0], [1], [0, 0, 1, 1], [], []>} : vector<16x16xf32>, vector<16x32xf32>, vector<16x32xf32> -> vector<16x32xf32>
    %c0_23 = arith.constant 0 : index
    %c0_24 = arith.constant 0 : index
    %33 = vector.load %arg9[%c0_23, %c0_24] : memref<32x128xf32, #tpu.memory_space<vmem>>, vector<32x128xf32>
    %cst_25 = arith.constant dense<0.000000e+00> : vector<16x128xf32>
    %34 = tpu.matmul %32, %33, %cst_25 {dimension_numbers = #tpu.dot_dimension_numbers<[1], [0], [0], [1], [0, 0, 1, 1], [], []>} : vector<16x32xf32>, vector<32x128xf32>, vector<16x128xf32> -> vector<16x128xf32>
    %c0_i32 = arith.constant 0 : i32
    %35 = arith.cmpi eq, %arg1, %c0_i32 : i32
    %36 = arith.extui %35 : i1 to i32
    %c0_i32_26 = arith.constant 0 : i32
    %37 = arith.cmpi ne, %36, %c0_i32_26 : i32
    scf.if %37 {
      %cst_32 = arith.constant 0.000000e+00 : f32
      %44 = vector.broadcast %cst_32 : f32 to vector<16x128xf32>
      %c0_33 = arith.constant 0 : index
      %c0_34 = arith.constant 0 : index
      %45 = vector.load %arg11[%c0_33, %c0_34] : memref<16x128xf32, #tpu.memory_space<vmem>>, vector<16x128xf32>
      tpu.vector_store %arg11[%c0_33, %c0_34], %44 {strides = array<i32>} : memref<16x128xf32, #tpu.memory_space<vmem>>, vector<16x128xf32>,
    } else {
    }
    %c0_27 = arith.constant 0 : index
    %c0_28 = arith.constant 0 : index
    %38 = vector.load %arg11[%c0_27, %c0_28] : memref<16x128xf32, #tpu.memory_space<vmem>>, vector<16x128xf32>
    %39 = arith.addf %38, %34 : vector<16x128xf32>
    %c0_29 = arith.constant 0 : index
    %c0_30 = arith.constant 0 : index
    %40 = vector.load %arg11[%c0_29, %c0_30] : memref<16x128xf32, #tpu.memory_space<vmem>>, vector<16x128xf32>
    tpu.vector_store %arg11[%c0_29, %c0_30], %39 {strides = array<i32>} : memref<16x128xf32, #tpu.memory_space<vmem>>, vector<16x128xf32>,
    %c3_i32 = arith.constant 3 : i32
    %41 = arith.cmpi eq, %arg1, %c3_i32 : i32
    %42 = arith.extui %41 : i1 to i32
    %c0_i32_31 = arith.constant 0 : i32
    %43 = arith.cmpi ne, %42, %c0_i32_31 : i32
    scf.if %43 {
      %c0_32 = arith.constant 0 : index
      %c0_33 = arith.constant 0 : index
      %44 = vector.load %arg11[%c0_32, %c0_33] : memref<16x128xf32, #tpu.memory_space<vmem>>, vector<16x128xf32>
      %c0_34 = arith.constant 0 : index
      %c0_35 = arith.constant 0 : index
      %c0_36 = arith.constant 0 : index
      %45 = vector.load %arg10[%c0_34, %c0_35, %c0_36] : memref<1x16x128xf32, #tpu.memory_space<vmem>>, vector<1x16x128xf32>
      %46 = vector.shape_cast %45 : vector<1x16x128xf32> to vector<16x128xf32>
      %47 = vector.shape_cast %44 : vector<16x128xf32> to vector<1x16x128xf32>
      tpu.vector_store %arg10[%c0_34, %c0_35, %c0_36], %47 {strides = array<i32>} : memref<1x16x128xf32, #tpu.memory_space<vmem>>, vector<1x16x128xf32>,
    } else {
    }
    return
  }
  func.func @transform_0(%arg0: i32, %arg1: i32) -> (i32, i32) {
    %c0_i32 = arith.constant 0 : i32
    %c0_i32_0 = arith.constant 0 : i32
    %c0_i32_1 = arith.constant 0 : i32
    return %c0_i32, %c0_i32_0 : i32, i32
  }
  func.func @transform_1(%arg0: i32, %arg1: i32) -> (i32, i32) {
    %c0_i32 = arith.constant 0 : i32
    %c0_i32_0 = arith.constant 0 : i32
    %c0_i32_1 = arith.constant 0 : i32
    return %c0_i32, %c0_i32_0 : i32, i32
  }
  func.func @transform_2(%arg0: i32, %arg1: i32) -> (i32, i32) {
    %c0_i32 = arith.constant 0 : i32
    %c0_i32_0 = arith.constant 0 : i32
    %c0_i32_1 = arith.constant 0 : i32
    return %c0_i32, %c0_i32_0 : i32, i32
  }
  func.func @transform_3(%arg0: i32, %arg1: i32) -> (i32, i32, i32) {
    %c0_i32 = arith.constant 0 : i32
    %c0_i32_0 = arith.constant 0 : i32
    %c0_i32_1 = arith.constant 0 : i32
    return %arg0, %c0_i32, %c0_i32_0 : i32, i32, i32
  }
  func.func @transform_4(%arg0: i32, %arg1: i32) -> (i32, i32) {
    %c0_i32 = arith.constant 0 : i32
    %c0_i32_0 = arith.constant 0 : i32
    return %arg1, %c0_i32 : i32, i32
  }
  func.func @transform_5(%arg0: i32, %arg1: i32) -> (i32, i32) {
    %c4_i32 = arith.constant 4 : i32
    %0 = arith.addi %c4_i32, %arg1 : i32
    %c0_i32 = arith.constant 0 : i32
    %c0_i32_0 = arith.constant 0 : i32
    return %0, %c0_i32 : i32, i32
  }
  func.func @transform_6(%arg0: i32, %arg1: i32) -> (i32, i32) {
    %c8_i32 = arith.constant 8 : i32
    %0 = arith.addi %c8_i32, %arg1 : i32
    %c0_i32 = arith.constant 0 : i32
    %c0_i32_0 = arith.constant 0 : i32
    return %0, %c0_i32 : i32, i32
  }
  func.func @transform_7(%arg0: i32, %arg1: i32) -> (i32, i32) {
    %c0_i32 = arith.constant 0 : i32
    %c0_i32_0 = arith.constant 0 : i32
    return %arg1, %c0_i32 : i32, i32
  }
  func.func @transform_8(%arg0: i32, %arg1: i32) -> (i32, i32, i32) {
    %c0_i32 = arith.constant 0 : i32
    %c0_i32_0 = arith.constant 0 : i32
    %c0_i32_1 = arith.constant 0 : i32
    return %arg0, %c0_i32, %c0_i32_0 : i32, i32, i32
  }
}

</mosaic_0001>

<llo_original>
// kernel: tpu_custom_call.1
$region0: #{tpu_custom_call.1}
  #allocation0 [shape = 'u32[]', space=smem, size = 0x4, offset = 0x4, fixed_abs, tag = 'smem constant byte address 0x4 - core index']
  #allocation1 [shape = 'u32[144,128]{1,0:T(1,128)}', space=vmem, size = 0x12000, scoped, tag = 'internal scratch']
  #allocation2 [shape = 'f32[16,128]{1,0:T(8,128)}', space=vmem, size = 0x2000, scoped, tag = 'scratch operand']
  %s0 = inlined_call_operand.hbm [shape: f32[16,32], index: 0, kind: input, shape index: {}]
  %s1 = inlined_call_operand.hbm [shape: f32[16,32], index: 1, kind: input, shape index: {}]
  %s2 = inlined_call_operand.hbm [shape: f32[32,32], index: 2, kind: input, shape index: {}]
  %s3 = inlined_call_operand.hbm [shape: f32[2,16,128], index: 3, kind: input, shape index: {}]
  %s4 = inlined_call_operand.hbm [shape: f32[384,128], index: 4, kind: input, shape index: {}]
  %s5 = inlined_call_operand.hbm [shape: f32[384,128], index: 5, kind: input, shape index: {}]
  %s6 = inlined_call_operand.hbm [shape: f32[384,128], index: 6, kind: input, shape index: {}]
  %s7 = inlined_call_operand.hbm [shape: f32[128,128], index: 7, kind: input, shape index: {}]
  %s8 = inlined_call_operand.hbm [shape: f32[2,16,128], index: 8, kind: output, shape index: {}]
  %s9 = sld [smem:[#allocation0]]
  $region105: #{tpu_custom_call.1} parent=0
    _
  %s11 = ssub.s32 1, %s9
  %s12 = scalar_select 0, %s11, %s9
  $region1: #{tpu_custom_call.1} parent=0
    #allocation3 [shape = 'u8[8192]{0}', space=vmem, size = 0x2000, scoped, tag = 'input window, operand 0, single buffered']
    #allocation4 [shape = 's32[2]{0}', space=sflag, size = 0x8, scoped, tag = 'scoped memory for tpu_custom_call.1']
    #allocation5 [shape = 's32[2]{0}', space=sflag, size = 0x8, scoped, tag = 'scoped memory for tpu_custom_call.1']
    #allocation6 [shape = 'u8[8192]{0}', space=vmem, size = 0x2000, scoped, tag = 'input window, operand 1, single buffered']
    #allocation7 [shape = 's32[1]{0}', space=sflag, size = 0x4, scoped, tag = 'scoped memory for tpu_custom_call.1']
    #allocation8 [shape = 'u8[16384]{0}', space=vmem, size = 0x4000, scoped, tag = 'input window, operand 2, single buffered']
    #allocation9 [shape = 'u8[16384]{0}', space=vmem, size = 0x4000, scoped, tag = 'input window, operand 3']
    #allocation10 [shape = 's32[2]{0}', space=sflag, size = 0x8, scoped, tag = 'scoped memory for tpu_custom_call.1']
    #allocation11 [shape = 'u8[32768]{0}', space=vmem, size = 0x8000, scoped, tag = 'input window, operand 4']
    #allocation12 [shape = 'u8[32768]{0}', space=vmem, size = 0x8000, scoped, tag = 'input window, operand 5']
    #allocation13 [shape = 's32[2]{0}', space=sflag, size = 0x8, scoped, tag = 'scoped memory for tpu_custom_call.1']
    #allocation14 [shape = 'u8[32768]{0}', space=vmem, size = 0x8000, scoped, tag = 'input window, operand 6']
    #allocation15 [shape = 'u8[32768]{0}', space=vmem, size = 0x8000, scoped, tag = 'input window, operand 7']
    #allocation16 [shape = 's32[2]{0}', space=sflag, size = 0x8, scoped, tag = 'scoped memory for tpu_custom_call.1']
    #allocation17 [shape = 'u8[16384]{0}', space=vmem, size = 0x4000, scoped, tag = 'output window, operand 0']
    %13 = vsyncpa [#allocation4], 0
    %14 = vsyncpa [#allocation7], 0
    %15 = vsyncpa [#allocation10], 0
    %s16 = scalar_lea.sflag [#allocation10], 1
    %17 = vsyncpa %s16, 0
    %18 = vsyncpa [#allocation13], 0
    %s19 = scalar_lea.sflag [#allocation13], 1
    %20 = vsyncpa %s19, 0
    %21 = vsyncpa [#allocation16], 0
    %s22 = scalar_lea.sflag [#allocation16], 1
    %23 = vsyncpa %s22, 0
    %24 = vsyncpa [#allocation5], 0
    %s25 = scalar_lea.sflag [#allocation5], 1
    %26 = vsyncpa %s25, 0
    loop: start=0, step=1, limit=10
    $region2: #{tpu_custom_call.1} parent=1 // loop_pre_header
      _
    $region3: #{tpu_custom_call.1} parent=1 // loop_header
      %s28 = sphi 0, %s32
      %p29 = scmp.ge.s32.totalorder %s28, 10
      %s35 = sphi 0, %s47
      %s36 = sphi 0, %s43
      %s37 = sphi 0, %s35
      %s38 = sphi 0, %s36
      %s39 = sphi 0, %s37
      %s40 = sphi 0, %s38
      %s48 = sphi 0, %s48
      %s50 = sphi 0, %s48
      %s51 = sphi 0, %s50
      %s65 = sphi 0, %s51
      %s69 = sphi 0, %s69
      %s71 = sphi 0, %s69
      %s72 = sphi 0, %s71
      %s86 = sphi 0, %s72
      %s90 = sphi 0, %s90
      %s92 = sphi 0, %s90
      %s93 = sphi 0, %s92
      %s107 = sphi 0, %s93
      %s113 = sphi 0, %s115
      %s116 = sphi 0, %s113
      %s117 = sphi 0, %s116
      %s133 = sphi 0, %s117
      %s139 = sphi 0, %s141
      %s142 = sphi 0, %s139
      %s143 = sphi 0, %s142
      %s159 = sphi 0, %s143
      %s167 = sphi 0, %s169
      %s170 = sphi 0, %s167
      %s171 = sphi 0, %s170
      %s187 = sphi 0, %s171
      %s195 = sphi 0, %s197
      %s198 = sphi 0, %s195
      %s199 = sphi 0, %s198
      %s215 = sphi 0, %s199
      %s221 = sphi 0, %s223
      %s224 = sphi 0, %s221
      %s225 = sphi 0, %s224
      %s241 = sphi 0, %s225
      %s247 = sphi 0, %s249
      %s250 = sphi 0, %s247
      %s251 = sphi 0, %s250
      %s267 = sphi 0, %s251
    $region4: #{tpu_custom_call.1} parent=1 // loop_header_branch
      %31 = sbr.rel (%p29) target = $region8
    $region5: #{tpu_custom_call.1} parent=1 // loop_body
      %s33 = ssub.s32 %s28, 1
      %s34 = ssub.s32 %s28, 2
      %s41 = sadd.s32 1, %s36
      %p42 = scmp.ge.s32.totalorder %s41, 4
      %s43 = scalar_select %p42, 0, %s41
      %s44 = sadd.s32 1, %s35
      %s45 = scalar_select %p42, %s44, %s35
      %p46 = scmp.ge.s32.totalorder %s45, 2
      %s47 = scalar_select %p46, 0, %s45
      %s49 = sadd.s32 %s48, 1
      %p52 = scmp.eq.s32.totalorder %s28, 7
      %p53 = scmp.ne.s32.totalorder %s48, %s50
      %p54 = scmp.eq.s32.totalorder %s28, 0
      %p55 = por %p53, %p54
      %p56 = scmp.ne.s32.totalorder %s48, %s50
      %p57 = scmp.eq.s32.totalorder %s33, 7
      %p58 = por %p56, %p57
      %p59 = scmp.ne.s32.totalorder %s50, %s51
      %p60 = scmp.eq.s32.totalorder %s33, 0
      %p61 = por %p59, %p60
      %p62 = scmp.ne.s32.totalorder %s50, %s51
      %p63 = scmp.eq.s32.totalorder %s34, 7
      %p64 = por %p62, %p63
      %p66 = scmp.ne.s32.totalorder %s51, %s65
      %p67 = scmp.eq.s32.totalorder %s34, 0
      %p68 = por %p66, %p67
      %s70 = sadd.s32 %s69, 1
      %p73 = scmp.eq.s32.totalorder %s28, 7
      %p74 = scmp.ne.s32.totalorder %s69, %s71
      %p75 = scmp.eq.s32.totalorder %s28, 0
      %p76 = por %p74, %p75
      %p77 = scmp.ne.s32.totalorder %s69, %s71
      %p78 = scmp.eq.s32.totalorder %s33, 7
      %p79 = por %p77, %p78
      %p80 = scmp.ne.s32.totalorder %s71, %s72
      %p81 = scmp.eq.s32.totalorder %s33, 0
      %p82 = por %p80, %p81
      %p83 = scmp.ne.s32.totalorder %s71, %s72
      %p84 = scmp.eq.s32.totalorder %s34, 7
      %p85 = por %p83, %p84
      %p87 = scmp.ne.s32.totalorder %s72, %s86
      %p88 = scmp.eq.s32.totalorder %s34, 0
      %p89 = por %p87, %p88
      %s91 = sadd.s32 %s90, 1
      %p94 = scmp.eq.s32.totalorder %s28, 7
      %p95 = scmp.ne.s32.totalorder %s90, %s92
      %p96 = scmp.eq.s32.totalorder %s28, 0
      %p97 = por %p95, %p96
      %p98 = scmp.ne.s32.totalorder %s90, %s92
      %p99 = scmp.eq.s32.totalorder %s33, 7
      %p100 = por %p98, %p99
      %p101 = scmp.ne.s32.totalorder %s92, %s93
      %p102 = scmp.eq.s32.totalorder %s33, 0
      %p103 = por %p101, %p102
      %p104 = scmp.ne.s32.totalorder %s92, %s93
      %p105 = scmp.eq.s32.totalorder %s34, 7
      %p106 = por %p104, %p105
      %p108 = scmp.ne.s32.totalorder %s93, %s107
      %p109 = scmp.eq.s32.totalorder %s34, 0
      %p110 = por %p108, %p109
      %s111 = ssub.s32 %s35, %s47
      %p112 = scmp.eq.s32.totalorder %s111, 0
      %s114 = sadd.s32 %s113, 1
      %s115 = scalar_select %p112, %s113, %s114
      %p118 = pneg %p112
      %p119 = scmp.eq.s32.totalorder %s28, 7
      %p120 = por %p118, %p119
      %p121 = scmp.ne.s32.totalorder %s113, %s116
      %p122 = scmp.eq.s32.totalorder %s28, 0
      %p123 = por %p121, %p122
      %p124 = scmp.ne.s32.totalorder %s113, %s116
      %p125 = scmp.eq.s32.totalorder %s33, 7
      %p126 = por %p124, %p125
      %p127 = scmp.ne.s32.totalorder %s116, %s117
      %p128 = scmp.eq.s32.totalorder %s33, 0
      %p129 = por %p127, %p128
      %p130 = scmp.ne.s32.totalorder %s116, %s117
      %p131 = scmp.eq.s32.totalorder %s34, 7
      %p132 = por %p130, %p131
      %p134 = scmp.ne.s32.totalorder %s117, %s133
      %p135 = scmp.eq.s32.totalorder %s34, 0
      %p136 = por %p134, %p135
      %s137 = ssub.s32 %s36, %s43
      %p138 = scmp.eq.s32.totalorder %s137, 0
      %s140 = sadd.s32 %s139, 1
      %s141 = scalar_select %p138, %s139, %s140
      %p144 = pneg %p138
      %p145 = scmp.eq.s32.totalorder %s28, 7
      %p146 = por %p144, %p145
      %p147 = scmp.ne.s32.totalorder %s139, %s142
      %p148 = scmp.eq.s32.totalorder %s28, 0
      %p149 = por %p147, %p148
      %p150 = scmp.ne.s32.totalorder %s139, %s142
      %p151 = scmp.eq.s32.totalorder %s33, 7
      %p152 = por %p150, %p151
      %p153 = scmp.ne.s32.totalorder %s142, %s143
      %p154 = scmp.eq.s32.totalorder %s33, 0
      %p155 = por %p153, %p154
      %p156 = scmp.ne.s32.totalorder %s142, %s143
      %p157 = scmp.eq.s32.totalorder %s34, 7
      %p158 = por %p156, %p157
      %p160 = scmp.ne.s32.totalorder %s143, %s159
      %p161 = scmp.eq.s32.totalorder %s34, 0
      %p162 = por %p160, %p161
      %s163 = sadd.s32 %s36, 4
      %s164 = sadd.s32 %s43, 4
      %s165 = ssub.s32 %s163, %s164
      %p166 = scmp.eq.s32.totalorder %s165, 0
      %s168 = sadd.s32 %s167, 1
      %s169 = scalar_select %p166, %s167, %s168
      %p172 = pneg %p166
      %p173 = scmp.eq.s32.totalorder %s28, 7
      %p174 = por %p172, %p173
      %p175 = scmp.ne.s32.totalorder %s167, %s170
      %p176 = scmp.eq.s32.totalorder %s28, 0
      %p177 = por %p175, %p176
      %p178 = scmp.ne.s32.totalorder %s167, %s170
      %p179 = scmp.eq.s32.totalorder %s33, 7
      %p180 = por %p178, %p179
      %p181 = scmp.ne.s32.totalorder %s170, %s171
      %p182 = scmp.eq.s32.totalorder %s33, 0
      %p183 = por %p181, %p182
      %p184 = scmp.ne.s32.totalorder %s170, %s171
      %p185 = scmp.eq.s32.totalorder %s34, 7
      %p186 = por %p184, %p185
      %p188 = scmp.ne.s32.totalorder %s171, %s187
      %p189 = scmp.eq.s32.totalorder %s34, 0
      %p190 = por %p188, %p189
      %s191 = sadd.s32 %s36, 8
      %s192 = sadd.s32 %s43, 8
      %s193 = ssub.s32 %s191, %s192
      %p194 = scmp.eq.s32.totalorder %s193, 0
      %s196 = sadd.s32 %s195, 1
      %s197 = scalar_select %p194, %s195, %s196
      %p200 = pneg %p194
      %p201 = scmp.eq.s32.totalorder %s28, 7
      %p202 = por %p200, %p201
      %p203 = scmp.ne.s32.totalorder %s195, %s198
      %p204 = scmp.eq.s32.totalorder %s28, 0
      %p205 = por %p203, %p204
      %p206 = scmp.ne.s32.totalorder %s195, %s198
      %p207 = scmp.eq.s32.totalorder %s33, 7
      %p208 = por %p206, %p207
      %p209 = scmp.ne.s32.totalorder %s198, %s199
      %p210 = scmp.eq.s32.totalorder %s33, 0
      %p211 = por %p209, %p210
      %p212 = scmp.ne.s32.totalorder %s198, %s199
      %p213 = scmp.eq.s32.totalorder %s34, 7
      %p214 = por %p212, %p213
      %p216 = scmp.ne.s32.totalorder %s199, %s215
      %p217 = scmp.eq.s32.totalorder %s34, 0
      %p218 = por %p216, %p217
      %s219 = ssub.s32 %s36, %s43
      %p220 = scmp.eq.s32.totalorder %s219, 0
      %s222 = sadd.s32 %s221, 1
      %s223 = scalar_select %p220, %s221, %s222
      %p226 = pneg %p220
      %p227 = scmp.eq.s32.totalorder %s28, 7
      %p228 = por %p226, %p227
      %p229 = scmp.ne.s32.totalorder %s221, %s224
      %p230 = scmp.eq.s32.totalorder %s28, 0
      %p231 = por %p229, %p230
      %p232 = scmp.ne.s32.totalorder %s221, %s224
      %p233 = scmp.eq.s32.totalorder %s33, 7
      %p234 = por %p232, %p233
      %p235 = scmp.ne.s32.totalorder %s224, %s225
      %p236 = scmp.eq.s32.totalorder %s33, 0
      %p237 = por %p235, %p236
      %p238 = scmp.ne.s32.totalorder %s224, %s225
      %p239 = scmp.eq.s32.totalorder %s34, 7
      %p240 = por %p238, %p239
      %p242 = scmp.ne.s32.totalorder %s225, %s241
      %p243 = scmp.eq.s32.totalorder %s34, 0
      %p244 = por %p242, %p243
      %s245 = ssub.s32 %s35, %s47
      %p246 = scmp.eq.s32.totalorder %s245, 0
      %s248 = sadd.s32 %s247, 1
      %s249 = scalar_select %p246, %s247, %s248
      %p252 = pneg %p246
      %p253 = scmp.eq.s32.totalorder %s28, 7
      %p254 = por %p252, %p253
      %p255 = scmp.ne.s32.totalorder %s247, %s250
      %p256 = scmp.eq.s32.totalorder %s28, 0
      %p257 = por %p255, %p256
      %p258 = scmp.ne.s32.totalorder %s247, %s250
      %p259 = scmp.eq.s32.totalorder %s33, 7
      %p260 = por %p258, %p259
      %p261 = scmp.ne.s32.totalorder %s250, %s251
      %p262 = scmp.eq.s32.totalorder %s33, 0
      %p263 = por %p261, %p262
      %p264 = scmp.ne.s32.totalorder %s250, %s251
      %p265 = scmp.eq.s32.totalorder %s34, 7
      %p266 = por %p264, %p265
      %p268 = scmp.ne.s32.totalorder %s251, %s267
      %p269 = scmp.eq.s32.totalorder %s34, 0
      %p270 = por %p268, %p269
      %p271 = scmp.le.s32.totalorder 1, %s28
      %p272 = scmp.lt.s32.totalorder %s28, 9
      %p273 = pnand %p271, %p272
      %p274 = pneg %p273
      // Predicated region
      $region9: #{tpu_custom_call.1} parent=5 // pred_check
        _
      $region10: #{tpu_custom_call.1} parent=5 // pred_check_branch
        %276 = sbr.rel (%p273) target = $region12
      $region11: #{tpu_custom_call.1} parent=5 // pred_region
        %s277 = ssub.s32 %s28, 1
        // Predicated region
        $region13: #{tpu_custom_call.1} parent=11 // pred_check
          %p278 = pneg %p61
        $region14: #{tpu_custom_call.1} parent=11 // pred_check_branch
          %280 = sbr.rel (%p278) target = $region16
        $region15: #{tpu_custom_call.1} parent=11 // pred_region
          %s282 = ssub.s32 256, 256
          %283 = vsyncadd [#allocation4], %s282
          %s284 = sshll.u32 [#allocation3], 4
          %s285 = int_to_ptr.vmem [resolvable:$true] %s284
          %290 = dma.hbm_to_vmem [thread:$0]  %s0, 256, %s285, [#allocation4], 128, 128, 8
        $region16: #{tpu_custom_call.1} parent=11 // pred_fallthru
          _
        // Predicated region
        $region17: #{tpu_custom_call.1} parent=11 // pred_check
          %p291 = pneg %p82
        $region18: #{tpu_custom_call.1} parent=11 // pred_check_branch
          %293 = sbr.rel (%p291) target = $region20
        $region19: #{tpu_custom_call.1} parent=11 // pred_region
          %s295 = ssub.s32 256, 256
          %296 = vsyncadd [#allocation7], %s295
          %s297 = sshll.u32 [#allocation6], 4
          %s298 = int_to_ptr.vmem [resolvable:$true] %s297
          %303 = dma.hbm_to_vmem [thread:$0]  %s1, 256, %s298, [#allocation7], 128, 128, 8
        $region20: #{tpu_custom_call.1} parent=11 // pred_fallthru
          _
        // Predicated region
        $region21: #{tpu_custom_call.1} parent=11 // pred_check
          %p304 = pneg %p103
        $region22: #{tpu_custom_call.1} parent=11 // pred_check_branch
          %306 = sbr.rel (%p304) target = $region24
        $region23: #{tpu_custom_call.1} parent=11 // pred_region
          %s308 = ssub.s32 512, 512
          %309 = vsyncadd [#allocation7], %s308
          %s310 = sshll.u32 [#allocation8], 4
          %s311 = int_to_ptr.vmem [resolvable:$true] %s310
          %316 = dma.hbm_to_vmem [thread:$0]  %s2, 512, %s311, [#allocation7], 128, 128, 8
        $region24: #{tpu_custom_call.1} parent=11 // pred_fallthru
          _
      $region12: #{tpu_custom_call.1} parent=5 // pred_fallthru
        _
      %p317 = scmp.lt.s32.totalorder %s28, 8
      // Predicated region
      $region25: #{tpu_custom_call.1} parent=5 // pred_check
        %p318 = pneg %p317
      $region26: #{tpu_custom_call.1} parent=5 // pred_check_branch
        %320 = sbr.rel (%p318) target = $region28
      $region27: #{tpu_custom_call.1} parent=5 // pred_region
        // Predicated region
        $region29: #{tpu_custom_call.1} parent=27 // pred_check
          %p321 = pneg %p123
        $region30: #{tpu_custom_call.1} parent=27 // pred_check_branch
          %323 = sbr.rel (%p321) target = $region32
        $region31: #{tpu_custom_call.1} parent=27 // pred_region
          %s324 = sand.u32 %s28, 1
          %s325 = scalar_lea.sflag [#allocation10], %s324
          %s326 = sand.u32 %s113, 1
          %s327 = smul.addr %s326, 16
          %s328 = scalar_lea.vmem [#allocation9], %s327
          %s330 = ssub.s32 256, 256
          %331 = vsyncadd %s325, %s330
          %s332 = smul.addr %s35, 2
          %s333 = smul.addr %s332, 128
          %s334 = scalar_lea.hbm %s3, %s333
          %s335 = sshll.u32 %s328, 4
          %s336 = int_to_ptr.vmem [resolvable:$true] %s335
          %341 = dma.hbm_to_vmem [thread:$0]  %s334, 256, %s336, %s325, 128, 128, 8
        $region32: #{tpu_custom_call.1} parent=27 // pred_fallthru
          _
        // Predicated region
        $region33: #{tpu_custom_call.1} parent=27 // pred_check
          %p342 = pneg %p149
        $region34: #{tpu_custom_call.1} parent=27 // pred_check_branch
          %344 = sbr.rel (%p342) target = $region36
        $region35: #{tpu_custom_call.1} parent=27 // pred_region
          %s345 = sand.u32 %s28, 1
          %s346 = scalar_lea.sflag [#allocation10], %s345
          %s347 = sand.u32 %s139, 1
          %s348 = smul.addr %s347, 32
          %s349 = scalar_lea.vmem [#allocation11], %s348
          %s350 = smul.u32 4, %s36
          %s352 = ssub.s32 512, 512
          %353 = vsyncadd %s346, %s352
          %s354 = smul.addr %s350, 128
          %s355 = scalar_lea.hbm %s4, %s354
          %s356 = sshll.u32 %s349, 4
          %s357 = int_to_ptr.vmem [resolvable:$true] %s356
          %362 = dma.hbm_to_vmem [thread:$0]  %s355, 512, %s357, %s346, 128, 128, 8
        $region36: #{tpu_custom_call.1} parent=27 // pred_fallthru
          _
        // Predicated region
        $region37: #{tpu_custom_call.1} parent=27 // pred_check
          %p363 = pneg %p177
        $region38: #{tpu_custom_call.1} parent=27 // pred_check_branch
          %365 = sbr.rel (%p363) target = $region40
        $region39: #{tpu_custom_call.1} parent=27 // pred_region
          %s366 = sand.u32 %s28, 1
          %s367 = scalar_lea.sflag [#allocation13], %s366
          %s368 = sand.u32 %s167, 1
          %s369 = smul.addr %s368, 32
          %s370 = scalar_lea.vmem [#allocation12], %s369
          %s371 = sadd.s32 %s36, 4
          %s372 = smul.u32 4, %s371
          %s374 = ssub.s32 512, 512
          %375 = vsyncadd %s367, %s374
          %s376 = smul.addr %s372, 128
          %s377 = scalar_lea.hbm %s5, %s376
          %s378 = sshll.u32 %s370, 4
          %s379 = int_to_ptr.vmem [resolvable:$true] %s378
          %384 = dma.hbm_to_vmem [thread:$0]  %s377, 512, %s379, %s367, 128, 128, 8
        $region40: #{tpu_custom_call.1} parent=27 // pred_fallthru
          _
        // Predicated region
        $region41: #{tpu_custom_call.1} parent=27 // pred_check
          %p385 = pneg %p205
        $region42: #{tpu_custom_call.1} parent=27 // pred_check_branch
          %387 = sbr.rel (%p385) target = $region44
        $region43: #{tpu_custom_call.1} parent=27 // pred_region
          %s388 = sand.u32 %s28, 1
          %s389 = scalar_lea.sflag [#allocation13], %s388
          %s390 = sand.u32 %s195, 1
          %s391 = smul.addr %s390, 32
          %s392 = scalar_lea.vmem [#allocation14], %s391
          %s393 = sadd.s32 %s36, 8
          %s394 = smul.u32 4, %s393
          %s396 = ssub.s32 512, 512
          %397 = vsyncadd %s389, %s396
          %s398 = smul.addr %s394, 128
          %s399 = scalar_lea.hbm %s6, %s398
          %s400 = sshll.u32 %s392, 4
          %s401 = int_to_ptr.vmem [resolvable:$true] %s400
          %406 = dma.hbm_to_vmem [thread:$0]  %s399, 512, %s401, %s389, 128, 128, 8
        $region44: #{tpu_custom_call.1} parent=27 // pred_fallthru
          _
        // Predicated region
        $region45: #{tpu_custom_call.1} parent=27 // pred_check
          %p407 = pneg %p231
        $region46: #{tpu_custom_call.1} parent=27 // pred_check_branch
          %409 = sbr.rel (%p407) target = $region48
        $region47: #{tpu_custom_call.1} parent=27 // pred_region
          %s410 = sand.u32 %s221, 1
          %s411 = scalar_lea.sflag [#allocation16], %s410
          %s412 = sand.u32 %s221, 1
          %s413 = smul.addr %s412, 32
          %s414 = scalar_lea.vmem [#allocation15], %s413
          %s415 = smul.u32 4, %s36
          %s417 = ssub.s32 512, 512
          %418 = vsyncadd %s411, %s417
          %s419 = smul.addr %s415, 128
          %s420 = scalar_lea.hbm %s7, %s419
          %s421 = sshll.u32 %s414, 4
          %s422 = int_to_ptr.vmem [resolvable:$true] %s421
          %427 = dma.hbm_to_vmem [thread:$0]  %s420, 512, %s422, %s411, 128, 128, 8
        $region48: #{tpu_custom_call.1} parent=27 // pred_fallthru
          _
      $region28: #{tpu_custom_call.1} parent=5 // pred_fallthru
        _
      %p428 = scmp.le.s32.totalorder 1, %s28
      %p429 = scmp.lt.s32.totalorder %s28, 9
      %p430 = pnand %p428, %p429
      %p431 = pneg %p430
      // Predicated region
      $region49: #{tpu_custom_call.1} parent=5 // pred_check
        _
      $region50: #{tpu_custom_call.1} parent=5 // pred_check_branch
        %433 = sbr.rel (%p430) target = $region52
      $region51: #{tpu_custom_call.1} parent=5 // pred_region
        %s434 = ssub.s32 %s28, 1
        // Predicated region
        $region53: #{tpu_custom_call.1} parent=51 // pred_check
          %p435 = pneg %p61
        $region54: #{tpu_custom_call.1} parent=51 // pred_check_branch
          %437 = sbr.rel (%p435) target = $region56
        $region55: #{tpu_custom_call.1} parent=51 // pred_region
          %438 = dma.done [#allocation4], 256
        $region56: #{tpu_custom_call.1} parent=51 // pred_fallthru
          _
        // Predicated region
        $region57: #{tpu_custom_call.1} parent=51 // pred_check
          %p439 = pneg %p82
        $region58: #{tpu_custom_call.1} parent=51 // pred_check_branch
          %441 = sbr.rel (%p439) target = $region60
        $region59: #{tpu_custom_call.1} parent=51 // pred_region
          %442 = dma.done [#allocation7], 256
        $region60: #{tpu_custom_call.1} parent=51 // pred_fallthru
          _
        // Predicated region
        $region61: #{tpu_custom_call.1} parent=51 // pred_check
          %p443 = pneg %p103
        $region62: #{tpu_custom_call.1} parent=51 // pred_check_branch
          %445 = sbr.rel (%p443) target = $region64
        $region63: #{tpu_custom_call.1} parent=51 // pred_region
          %446 = dma.done [#allocation7], 512
        $region64: #{tpu_custom_call.1} parent=51 // pred_fallthru
          _
        %s447 = sand.u32 %s33, 1
        %s448 = scalar_lea.sflag [#allocation10], %s447
        %s449 = sand.u32 %s116, 1
        %s450 = smul.addr %s449, 16
        %s451 = scalar_lea.vmem [#allocation9], %s450
        // Predicated region
        $region65: #{tpu_custom_call.1} parent=51 // pred_check
          %p452 = pneg %p129
        $region66: #{tpu_custom_call.1} parent=51 // pred_check_branch
          %454 = sbr.rel (%p452) target = $region68
        $region67: #{tpu_custom_call.1} parent=51 // pred_region
          %455 = dma.done %s448, 256
        $region68: #{tpu_custom_call.1} parent=51 // pred_fallthru
          _
        %s456 = sand.u32 %s33, 1
        %s457 = scalar_lea.sflag [#allocation10], %s456
        %s458 = sand.u32 %s142, 1
        %s459 = smul.addr %s458, 32
        %s460 = scalar_lea.vmem [#allocation11], %s459
        // Predicated region
        $region69: #{tpu_custom_call.1} parent=51 // pred_check
          %p461 = pneg %p155
        $region70: #{tpu_custom_call.1} parent=51 // pred_check_branch
          %463 = sbr.rel (%p461) target = $region72
        $region71: #{tpu_custom_call.1} parent=51 // pred_region
          %464 = dma.done %s457, 512
        $region72: #{tpu_custom_call.1} parent=51 // pred_fallthru
          _
        %s465 = sand.u32 %s33, 1
        %s466 = scalar_lea.sflag [#allocation13], %s465
        %s467 = sand.u32 %s170, 1
        %s468 = smul.addr %s467, 32
        %s469 = scalar_lea.vmem [#allocation12], %s468
        // Predicated region
        $region73: #{tpu_custom_call.1} parent=51 // pred_check
          %p470 = pneg %p183
        $region74: #{tpu_custom_call.1} parent=51 // pred_check_branch
          %472 = sbr.rel (%p470) target = $region76
        $region75: #{tpu_custom_call.1} parent=51 // pred_region
          %473 = dma.done %s466, 512
        $region76: #{tpu_custom_call.1} parent=51 // pred_fallthru
          _
        %s474 = sand.u32 %s33, 1
        %s475 = scalar_lea.sflag [#allocation13], %s474
        %s476 = sand.u32 %s198, 1
        %s477 = smul.addr %s476, 32
        %s478 = scalar_lea.vmem [#allocation14], %s477
        // Predicated region
        $region77: #{tpu_custom_call.1} parent=51 // pred_check
          %p479 = pneg %p211
        $region78: #{tpu_custom_call.1} parent=51 // pred_check_branch
          %481 = sbr.rel (%p479) target = $region80
        $region79: #{tpu_custom_call.1} parent=51 // pred_region
          %482 = dma.done %s475, 512
        $region80: #{tpu_custom_call.1} parent=51 // pred_fallthru
          _
        %s483 = sand.u32 %s224, 1
        %s484 = scalar_lea.sflag [#allocation16], %s483
        %s485 = sand.u32 %s224, 1
        %s486 = smul.addr %s485, 32
        %s487 = scalar_lea.vmem [#allocation15], %s486
        // Predicated region
        $region81: #{tpu_custom_call.1} parent=51 // pred_check
          %p488 = pneg %p237
        $region82: #{tpu_custom_call.1} parent=51 // pred_check_branch
          %490 = sbr.rel (%p488) target = $region84
        $region83: #{tpu_custom_call.1} parent=51 // pred_region
          %491 = dma.done %s484, 512
        $region84: #{tpu_custom_call.1} parent=51 // pred_fallthru
          _
        %p492 = pneg %p61
        %p493 = pneg %p58
        %p494 = pneg %p82
        %p495 = pneg %p79
        %p496 = pneg %p103
        %p497 = pneg %p100
        %s498 = sand.u32 %s33, 1
        %s499 = scalar_lea.sflag [#allocation10], %s498
        %s500 = sand.u32 %s116, 1
        %s501 = smul.addr %s500, 16
        %s502 = scalar_lea.vmem [#allocation9], %s501
        %p503 = pneg %p129
        %p504 = pneg %p126
        %s505 = sand.u32 %s33, 1
        %s506 = scalar_lea.sflag [#allocation10], %s505
        %s507 = sand.u32 %s142, 1
        %s508 = smul.addr %s507, 32
        %s509 = scalar_lea.vmem [#allocation11], %s508
        %p510 = pneg %p155
        %p511 = pneg %p152
        %s512 = sand.u32 %s33, 1
        %s513 = scalar_lea.sflag [#allocation13], %s512
        %s514 = sand.u32 %s170, 1
        %s515 = smul.addr %s514, 32
        %s516 = scalar_lea.vmem [#allocation12], %s515
        %p517 = pneg %p183
        %p518 = pneg %p180
        %s519 = sand.u32 %s33, 1
        %s520 = scalar_lea.sflag [#allocation13], %s519
        %s521 = sand.u32 %s198, 1
        %s522 = smul.addr %s521, 32
        %s523 = scalar_lea.vmem [#allocation14], %s522
        %p524 = pneg %p211
        %p525 = pneg %p208
        %s526 = sand.u32 %s224, 1
        %s527 = scalar_lea.sflag [#allocation16], %s526
        %s528 = sand.u32 %s224, 1
        %s529 = smul.addr %s528, 32
        %s530 = scalar_lea.vmem [#allocation15], %s529
        %p531 = pneg %p237
        %p532 = pneg %p234
        %p533 = pneg %p263
        %p534 = pneg %p260
        %s535 = sand.u32 %s250, 1
        %s536 = scalar_lea.sflag [#allocation5], %s535
        %s537 = sand.u32 %s250, 1
        %s538 = smul.addr %s537, 16
        %s539 = scalar_lea.vmem [#allocation17], %s538
        %s540 = smul.u32 4, %s38
        %s541 = sadd.s32 %s38, 4
        %s542 = smul.u32 4, %s541
        %s543 = sadd.s32 %s38, 8
        %s544 = smul.u32 4, %s543
        %s545 = smul.u32 4, %s38
        %v546 = vld [vmem:[%s451] sm:$0xff]
        %v547 = vld [vmem:[%s451 + $0x8] sm:$0xff]
        %v548 = vld [vmem:[%s460] sm:$0xff]
        %v549 = vld [vmem:[%s460 + $0x8] sm:$0xff]
        %v550 = vld [vmem:[%s460 + $0x10] sm:$0xff]
        %v551 = vld [vmem:[%s460 + $0x18] sm:$0xff]
        %552 = vmatprep.subr.mxu0 0.0
        %553 = vmatpush1.xpose.msra.mxu0 0.0
        %554 = vmatprep.subr.mxu0 0.0
        %555 = vmatpush1.xpose.msra.mxu0 0.0
        %556 = vmatprep.subr.mxu0 0.0
        %557 = vmatpush1.xpose.msra.mxu0 0.0
        %558 = vmatprep.subr.mxu0 0.0
        %559 = vmatpush1.xpose.msra.mxu0 0.0
        %560 = vmatprep.subr.mxu0 0.0
        %561 = vmatpush1.xpose.msra.mxu0 0.0
        %562 = vmatprep.subr.mxu0 0.0
        %563 = vmatpush1.xpose.msra.mxu0 0.0
        %564 = vmatprep.subr.mxu0 0.0
        %565 = vmatpush1.xpose.msra.mxu0 0.0
        %566 = vmatprep.subr.mxu0 0.0
        %567 = vmatpush1.xpose.msra.mxu0 0.0
        %568 = vmatprep.subr.mxu0 0.0
        %569 = vmatpush1.xpose.msra.mxu0 0.0
        %570 = vmatprep.subr.mxu0 0.0
        %571 = vmatpush1.xpose.msra.mxu0 0.0
        %572 = vmatprep.subr.mxu0 0.0
        %573 = vmatpush1.xpose.msra.mxu0 0.0
        %574 = vmatprep.subr.mxu0 0.0
        %575 = vmatpush1.xpose.msra.mxu0 0.0
        %576 = vmatprep.subr.mxu0 0.0
        %577 = vmatpush1.xpose.msra.mxu0 %v551
        %578 = vmatprep.subr.mxu0 0.0
        %579 = vmatpush1.xpose.msra.mxu0 %v550
        %580 = vmatprep.subr.mxu0 0.0
        %581 = vmatpush1.xpose.msra.mxu0 %v549
        %582 = vmatprep.subr.mxu0 0.0
        %583 = vmatpush1.xpose.msra.mxu0 %v548
        %584 = vmatprep.subr.mxu0 0.0
        %585 = vmatpush2.xpose.msra.mxu0 0.0
        %586 = vmatprep.subr.mxu0 0.0
        %587 = vmatpush2.xpose.msra.mxu0 0.0
        %588 = vmatprep.subr.mxu0 0.0
        %589 = vmatpush2.xpose.msra.mxu0 0.0
        %590 = vmatprep.subr.mxu0 0.0
        %591 = vmatpush2.xpose.msra.mxu0 0.0
        %592 = vmatprep.subr.mxu0 0.0
        %593 = vmatpush2.xpose.msra.mxu0 0.0
        %594 = vmatprep.subr.mxu0 0.0
        %595 = vmatpush2.xpose.msra.mxu0 0.0
        %596 = vmatprep.subr.mxu0 0.0
        %597 = vmatpush2.xpose.msra.mxu0 0.0
        %598 = vmatprep.subr.mxu0 0.0
        %599 = vmatpush2.xpose.msra.mxu0 0.0
        %600 = vmatprep.subr.mxu0 0.0
        %601 = vmatpush2.xpose.msra.mxu0 0.0
        %602 = vmatprep.subr.mxu0 0.0
        %603 = vmatpush2.xpose.msra.mxu0 0.0
        %604 = vmatprep.subr.mxu0 0.0
        %605 = vmatpush2.xpose.msra.mxu0 0.0
        %606 = vmatprep.subr.mxu0 0.0
        %607 = vmatpush2.xpose.msra.mxu0 0.0
        %608 = vmatprep.subr.mxu0 0.0
        %609 = vmatpush2.xpose.msra.mxu0 0.0
        %610 = vmatprep.subr.mxu0 0.0
        %611 = vmatpush2.xpose.msra.mxu0 0.0
        %612 = vmatprep.subr.mxu0 0.0
        %613 = vmatpush2.xpose.msra.mxu0 0.0
        %614 = vmatprep.subr.mxu0 0.0
        %615 = vmatpush2.xpose.msra.mxu0 0.0
        %616 = vmatprep.mubr.f32.mxu0 0.0
        %617 = vmatmul.mubr.f32.gmra.mxu0 %v546
        %v618 = vpop.f32.mrf.mxu0
        %v619 = vadd.f32 0.0, %v618
        %v620 = vpop.f32.mrf.mxu0
        %621 = vmatprep.mubr.f32.mxu0 0.0
        %622 = vmatmul.mubr.f32.gmra.mxu0 %v547
        %v623 = vpop.f32.mrf.mxu0
        %v624 = vadd.f32 0.0, %v623
        %v625 = vpop.f32.mrf.mxu0
        %626 = vdwg.mxu0
        %v627 = vld [vmem:[%s469] sm:$0xff]
        %v628 = vld [vmem:[%s469 + $0x8] sm:$0xff]
        %v629 = vld [vmem:[%s469 + $0x10] sm:$0xff]
        %v630 = vld [vmem:[%s469 + $0x18] sm:$0xff]
        %631 = vmatprep.subr.mxu0 0.0
        %632 = vmatpush1.xpose.msra.mxu0 0.0
        %633 = vmatprep.subr.mxu0 0.0
        %634 = vmatpush1.xpose.msra.mxu0 0.0
        %635 = vmatprep.subr.mxu0 0.0
        %636 = vmatpush1.xpose.msra.mxu0 0.0
        %637 = vmatprep.subr.mxu0 0.0
        %638 = vmatpush1.xpose.msra.mxu0 0.0
        %639 = vmatprep.subr.mxu0 0.0
        %640 = vmatpush1.xpose.msra.mxu0 0.0
        %641 = vmatprep.subr.mxu0 0.0
        %642 = vmatpush1.xpose.msra.mxu0 0.0
        %643 = vmatprep.subr.mxu0 0.0
        %644 = vmatpush1.xpose.msra.mxu0 0.0
        %645 = vmatprep.subr.mxu0 0.0
        %646 = vmatpush1.xpose.msra.mxu0 0.0
        %647 = vmatprep.subr.mxu0 0.0
        %648 = vmatpush1.xpose.msra.mxu0 0.0
        %649 = vmatprep.subr.mxu0 0.0
        %650 = vmatpush1.xpose.msra.mxu0 0.0
        %651 = vmatprep.subr.mxu0 0.0
        %652 = vmatpush1.xpose.msra.mxu0 0.0
        %653 = vmatprep.subr.mxu0 0.0
        %654 = vmatpush1.xpose.msra.mxu0 0.0
        %655 = vmatprep.subr.mxu0 0.0
        %656 = vmatpush1.xpose.msra.mxu0 %v630
        %657 = vmatprep.subr.mxu0 0.0
        %658 = vmatpush1.xpose.msra.mxu0 %v629
        %659 = vmatprep.subr.mxu0 0.0
        %660 = vmatpush1.xpose.msra.mxu0 %v628
        %661 = vmatprep.subr.mxu0 0.0
        %662 = vmatpush1.xpose.msra.mxu0 %v627
        %663 = vmatprep.subr.mxu0 0.0
        %664 = vmatpush2.xpose.msra.mxu0 0.0
        %665 = vmatprep.subr.mxu0 0.0
        %666 = vmatpush2.xpose.msra.mxu0 0.0
        %667 = vmatprep.subr.mxu0 0.0
        %668 = vmatpush2.xpose.msra.mxu0 0.0
        %669 = vmatprep.subr.mxu0 0.0
        %670 = vmatpush2.xpose.msra.mxu0 0.0
        %671 = vmatprep.subr.mxu0 0.0
        %672 = vmatpush2.xpose.msra.mxu0 0.0
        %673 = vmatprep.subr.mxu0 0.0
        %674 = vmatpush2.xpose.msra.mxu0 0.0
        %675 = vmatprep.subr.mxu0 0.0
        %676 = vmatpush2.xpose.msra.mxu0 0.0
        %677 = vmatprep.subr.mxu0 0.0
        %678 = vmatpush2.xpose.msra.mxu0 0.0
        %679 = vmatprep.subr.mxu0 0.0
        %680 = vmatpush2.xpose.msra.mxu0 0.0
        %681 = vmatprep.subr.mxu0 0.0
        %682 = vmatpush2.xpose.msra.mxu0 0.0
        %683 = vmatprep.subr.mxu0 0.0
        %684 = vmatpush2.xpose.msra.mxu0 0.0
        %685 = vmatprep.subr.mxu0 0.0
        %686 = vmatpush2.xpose.msra.mxu0 0.0
        %687 = vmatprep.subr.mxu0 0.0
        %688 = vmatpush2.xpose.msra.mxu0 0.0
        %689 = vmatprep.subr.mxu0 0.0
        %690 = vmatpush2.xpose.msra.mxu0 0.0
        %691 = vmatprep.subr.mxu0 0.0
        %692 = vmatpush2.xpose.msra.mxu0 0.0
        %693 = vmatprep.subr.mxu0 0.0
        %694 = vmatpush2.xpose.msra.mxu0 0.0
        %695 = vmatprep.mubr.f32.mxu0 0.0
        %696 = vmatmul.mubr.f32.gmra.mxu0 %v546
        %v697 = vpop.f32.mrf.mxu0
        %v698 = vadd.f32 0.0, %v697
        %v699 = vpop.f32.mrf.mxu0
        %700 = vmatprep.mubr.f32.mxu0 0.0
        %701 = vmatmul.mubr.f32.gmra.mxu0 %v547
        %v702 = vpop.f32.mrf.mxu0
        %v703 = vadd.f32 0.0, %v702
        %v704 = vpop.f32.mrf.mxu0
        %705 = vdwg.mxu0
        %v706 = vld [vmem:[%s478] sm:$0xff]
        %v707 = vld [vmem:[%s478 + $0x8] sm:$0xff]
        %v708 = vld [vmem:[%s478 + $0x10] sm:$0xff]
        %v709 = vld [vmem:[%s478 + $0x18] sm:$0xff]
        %710 = vmatprep.subr.mxu0 0.0
        %711 = vmatpush1.xpose.msra.mxu0 0.0
        %712 = vmatprep.subr.mxu0 0.0
        %713 = vmatpush1.xpose.msra.mxu0 0.0
        %714 = vmatprep.subr.mxu0 0.0
        %715 = vmatpush1.xpose.msra.mxu0 0.0
        %716 = vmatprep.subr.mxu0 0.0
        %717 = vmatpush1.xpose.msra.mxu0 0.0
        %718 = vmatprep.subr.mxu0 0.0
        %719 = vmatpush1.xpose.msra.mxu0 0.0
        %720 = vmatprep.subr.mxu0 0.0
        %721 = vmatpush1.xpose.msra.mxu0 0.0
        %722 = vmatprep.subr.mxu0 0.0
        %723 = vmatpush1.xpose.msra.mxu0 0.0
        %724 = vmatprep.subr.mxu0 0.0
        %725 = vmatpush1.xpose.msra.mxu0 0.0
        %726 = vmatprep.subr.mxu0 0.0
        %727 = vmatpush1.xpose.msra.mxu0 0.0
        %728 = vmatprep.subr.mxu0 0.0
        %729 = vmatpush1.xpose.msra.mxu0 0.0
        %730 = vmatprep.subr.mxu0 0.0
        %731 = vmatpush1.xpose.msra.mxu0 0.0
        %732 = vmatprep.subr.mxu0 0.0
        %733 = vmatpush1.xpose.msra.mxu0 0.0
        %734 = vmatprep.subr.mxu0 0.0
        %735 = vmatpush1.xpose.msra.mxu0 %v709
        %736 = vmatprep.subr.mxu0 0.0
        %737 = vmatpush1.xpose.msra.mxu0 %v708
        %738 = vmatprep.subr.mxu0 0.0
        %739 = vmatpush1.xpose.msra.mxu0 %v707
        %740 = vmatprep.subr.mxu0 0.0
        %741 = vmatpush1.xpose.msra.mxu0 %v706
        %742 = vmatprep.subr.mxu0 0.0
        %743 = vmatpush2.xpose.msra.mxu0 0.0
        %744 = vmatprep.subr.mxu0 0.0
        %745 = vmatpush2.xpose.msra.mxu0 0.0
        %746 = vmatprep.subr.mxu0 0.0
        %747 = vmatpush2.xpose.msra.mxu0 0.0
        %748 = vmatprep.subr.mxu0 0.0
        %749 = vmatpush2.xpose.msra.mxu0 0.0
        %750 = vmatprep.subr.mxu0 0.0
        %751 = vmatpush2.xpose.msra.mxu0 0.0
        %752 = vmatprep.subr.mxu0 0.0
        %753 = vmatpush2.xpose.msra.mxu0 0.0
        %754 = vmatprep.subr.mxu0 0.0
        %755 = vmatpush2.xpose.msra.mxu0 0.0
        %756 = vmatprep.subr.mxu0 0.0
        %757 = vmatpush2.xpose.msra.mxu0 0.0
        %758 = vmatprep.subr.mxu0 0.0
        %759 = vmatpush2.xpose.msra.mxu0 0.0
        %760 = vmatprep.subr.mxu0 0.0
        %761 = vmatpush2.xpose.msra.mxu0 0.0
        %762 = vmatprep.subr.mxu0 0.0
        %763 = vmatpush2.xpose.msra.mxu0 0.0
        %764 = vmatprep.subr.mxu0 0.0
        %765 = vmatpush2.xpose.msra.mxu0 0.0
        %766 = vmatprep.subr.mxu0 0.0
        %767 = vmatpush2.xpose.msra.mxu0 0.0
        %768 = vmatprep.subr.mxu0 0.0
        %769 = vmatpush2.xpose.msra.mxu0 0.0
        %770 = vmatprep.subr.mxu0 0.0
        %771 = vmatpush2.xpose.msra.mxu0 0.0
        %772 = vmatprep.subr.mxu0 0.0
        %773 = vmatpush2.xpose.msra.mxu0 0.0
        %774 = vmatprep.mubr.f32.mxu0 0.0
        %775 = vmatmul.mubr.f32.gmra.mxu0 %v546
        %v776 = vpop.f32.mrf.mxu0
        %v777 = vadd.f32 0.0, %v776
        %v778 = vpop.f32.mrf.mxu0
        %779 = vmatprep.mubr.f32.mxu0 0.0
        %780 = vmatmul.mubr.f32.gmra.mxu0 %v547
        %v781 = vpop.f32.mrf.mxu0
        %v782 = vadd.f32 0.0, %v781
        %v783 = vpop.f32.mrf.mxu0
        %784 = vdwg.mxu0
        %v785 = vld [vmem:[#allocation3] sm:$0xff]
        %v786 = vld [vmem:[#allocation3 + $0x8] sm:$0xff]
        %v787 = vld [vmem:[#allocation6] sm:$0xff]
        %v788 = vld [vmem:[#allocation6 + $0x8] sm:$0xff]
        %v789 = vld [vmem:[#allocation8] sm:$0xff]
        %v790 = vld [vmem:[#allocation8 + $0x8] sm:$0xff]
        %v791 = vld [vmem:[#allocation8 + $0x10] sm:$0xff]
        %v792 = vld [vmem:[#allocation8 + $0x18] sm:$0xff]
        %v793 = vmul.f32 %v619, 0.17677669
        %v794 = vmul.f32 %v624, 0.17677669
        %v795 = vmul.f32 %v793, %v787
        %v796 = vmul.f32 %v794, %v788
        %vm797 = vcmask 261120
        %v799 = vsel %vm797, %v793, 0
        %v802 = vsel %vm797, %v794, 0
        %804 = vmatprep.subr.mxu0 0.0
        %805 = vmatpush1.msra.mxu0 0.0
        %806 = vmatprep.subr.mxu0 0.0
        %807 = vmatpush1.msra.mxu0 0.0
        %808 = vmatprep.subr.mxu0 0.0
        %809 = vmatpush1.msra.mxu0 0.0
        %810 = vmatprep.subr.mxu0 0.0
        %811 = vmatpush1.msra.mxu0 0.0
        %812 = vmatprep.subr.mxu0 0.0
        %813 = vmatpush1.msra.mxu0 0.0
        %814 = vmatprep.subr.mxu0 0.0
        %815 = vmatpush1.msra.mxu0 0.0
        %816 = vmatprep.subr.mxu0 0.0
        %817 = vmatpush1.msra.mxu0 0.0
        %818 = vmatprep.subr.mxu0 0.0
        %819 = vmatpush1.msra.mxu0 0.0
        %820 = vmatprep.subr.mxu0 0.0
        %821 = vmatpush1.msra.mxu0 0.0
        %822 = vmatprep.subr.mxu0 0.0
        %823 = vmatpush1.msra.mxu0 0.0
        %824 = vmatprep.subr.mxu0 0.0
        %825 = vmatpush1.msra.mxu0 0.0
        %826 = vmatprep.subr.mxu0 0.0
        %827 = vmatpush1.msra.mxu0 0.0
        %828 = vmatprep.subr.mxu0 0.0
        %829 = vmatpush1.msra.mxu0 %v792
        %830 = vmatprep.subr.mxu0 0.0
        %831 = vmatpush1.msra.mxu0 %v791
        %832 = vmatprep.subr.mxu0 0.0
        %833 = vmatpush1.msra.mxu0 %v790
        %834 = vmatprep.subr.mxu0 0.0
        %835 = vmatpush1.msra.mxu0 %v789
        %836 = vmatprep.subr.mxu0 0.0
        %837 = vmatpush2.msra.mxu0 0.0
        %838 = vmatprep.subr.mxu0 0.0
        %839 = vmatpush2.msra.mxu0 0.0
        %840 = vmatprep.subr.mxu0 0.0
        %841 = vmatpush2.msra.mxu0 0.0
        %842 = vmatprep.subr.mxu0 0.0
        %843 = vmatpush2.msra.mxu0 0.0
        %844 = vmatprep.subr.mxu0 0.0
        %845 = vmatpush2.msra.mxu0 0.0
        %846 = vmatprep.subr.mxu0 0.0
        %847 = vmatpush2.msra.mxu0 0.0
        %848 = vmatprep.subr.mxu0 0.0
        %849 = vmatpush2.msra.mxu0 0.0
        %850 = vmatprep.subr.mxu0 0.0
        %851 = vmatpush2.msra.mxu0 0.0
        %852 = vmatprep.subr.mxu0 0.0
        %853 = vmatpush2.msra.mxu0 0.0
        %854 = vmatprep.subr.mxu0 0.0
        %855 = vmatpush2.msra.mxu0 0.0
        %856 = vmatprep.subr.mxu0 0.0
        %857 = vmatpush2.msra.mxu0 0.0
        %858 = vmatprep.subr.mxu0 0.0
        %859 = vmatpush2.msra.mxu0 0.0
        %860 = vmatprep.subr.mxu0 0.0
        %861 = vmatpush2.msra.mxu0 0.0
        %862 = vmatprep.subr.mxu0 0.0
        %863 = vmatpush2.msra.mxu0 0.0
        %864 = vmatprep.subr.mxu0 0.0
        %865 = vmatpush2.msra.mxu0 0.0
        %866 = vmatprep.subr.mxu0 0.0
        %867 = vmatpush2.msra.mxu0 0.0
        %868 = vmatprep.mubr.f32.mxu0 0.0
        %869 = vmatmul.mubr.f32.gmra.mxu0 %v799
        %v870 = vpop.f32.mrf.mxu0
        %v871 = vadd.f32 0.0, %v870
        %v872 = vpop.f32.mrf.mxu0
        %873 = vmatprep.mubr.f32.mxu0 0.0
        %874 = vmatmul.mubr.f32.gmra.mxu0 %v802
        %v875 = vpop.f32.mrf.mxu0
        %v876 = vadd.f32 0.0, %v875
        %v877 = vpop.f32.mrf.mxu0
        %878 = vdwg.mxu0
        %v879 = vmul.f32 %v871, %v785
        %v880 = vmul.f32 %v876, %v786
        %v881 = vadd.f32 %v795, %v879
        %v882 = vadd.f32 %v796, %v880
        %v883 = vmul.f32 %v698, %v787
        %v884 = vmul.f32 %v703, %v788
        %v886 = vsel %vm797, %v698, 0
        %v889 = vsel %vm797, %v703, 0
        %891 = vmatprep.subr.mxu0 0.0
        %892 = vmatpush1.msra.mxu0 0.0
        %893 = vmatprep.subr.mxu0 0.0
        %894 = vmatpush1.msra.mxu0 0.0
        %895 = vmatprep.subr.mxu0 0.0
        %896 = vmatpush1.msra.mxu0 0.0
        %897 = vmatprep.subr.mxu0 0.0
        %898 = vmatpush1.msra.mxu0 0.0
        %899 = vmatprep.subr.mxu0 0.0
        %900 = vmatpush1.msra.mxu0 0.0
        %901 = vmatprep.subr.mxu0 0.0
        %902 = vmatpush1.msra.mxu0 0.0
        %903 = vmatprep.subr.mxu0 0.0
        %904 = vmatpush1.msra.mxu0 0.0
        %905 = vmatprep.subr.mxu0 0.0
        %906 = vmatpush1.msra.mxu0 0.0
        %907 = vmatprep.subr.mxu0 0.0
        %908 = vmatpush1.msra.mxu0 0.0
        %909 = vmatprep.subr.mxu0 0.0
        %910 = vmatpush1.msra.mxu0 0.0
        %911 = vmatprep.subr.mxu0 0.0
        %912 = vmatpush1.msra.mxu0 0.0
        %913 = vmatprep.subr.mxu0 0.0
        %914 = vmatpush1.msra.mxu0 0.0
        %915 = vmatprep.subr.mxu0 0.0
        %916 = vmatpush1.msra.mxu0 %v792
        %917 = vmatprep.subr.mxu0 0.0
        %918 = vmatpush1.msra.mxu0 %v791
        %919 = vmatprep.subr.mxu0 0.0
        %920 = vmatpush1.msra.mxu0 %v790
        %921 = vmatprep.subr.mxu0 0.0
        %922 = vmatpush1.msra.mxu0 %v789
        %923 = vmatprep.subr.mxu0 0.0
        %924 = vmatpush2.msra.mxu0 0.0
        %925 = vmatprep.subr.mxu0 0.0
        %926 = vmatpush2.msra.mxu0 0.0
        %927 = vmatprep.subr.mxu0 0.0
        %928 = vmatpush2.msra.mxu0 0.0
        %929 = vmatprep.subr.mxu0 0.0
        %930 = vmatpush2.msra.mxu0 0.0
        %931 = vmatprep.subr.mxu0 0.0
        %932 = vmatpush2.msra.mxu0 0.0
        %933 = vmatprep.subr.mxu0 0.0
        %934 = vmatpush2.msra.mxu0 0.0
        %935 = vmatprep.subr.mxu0 0.0
        %936 = vmatpush2.msra.mxu0 0.0
        %937 = vmatprep.subr.mxu0 0.0
        %938 = vmatpush2.msra.mxu0 0.0
        %939 = vmatprep.subr.mxu0 0.0
        %940 = vmatpush2.msra.mxu0 0.0
        %941 = vmatprep.subr.mxu0 0.0
        %942 = vmatpush2.msra.mxu0 0.0
        %943 = vmatprep.subr.mxu0 0.0
        %944 = vmatpush2.msra.mxu0 0.0
        %945 = vmatprep.subr.mxu0 0.0
        %946 = vmatpush2.msra.mxu0 0.0
        %947 = vmatprep.subr.mxu0 0.0
        %948 = vmatpush2.msra.mxu0 0.0
        %949 = vmatprep.subr.mxu0 0.0
        %950 = vmatpush2.msra.mxu0 0.0
        %951 = vmatprep.subr.mxu0 0.0
        %952 = vmatpush2.msra.mxu0 0.0
        %953 = vmatprep.subr.mxu0 0.0
        %954 = vmatpush2.msra.mxu0 0.0
        %955 = vmatprep.mubr.f32.mxu0 0.0
        %956 = vmatmul.mubr.f32.gmra.mxu0 %v886
        %v957 = vpop.f32.mrf.mxu0
        %v958 = vadd.f32 0.0, %v957
        %v959 = vpop.f32.mrf.mxu0
        %960 = vmatprep.mubr.f32.mxu0 0.0
        %961 = vmatmul.mubr.f32.gmra.mxu0 %v889
        %v962 = vpop.f32.mrf.mxu0
        %v963 = vadd.f32 0.0, %v962
        %v964 = vpop.f32.mrf.mxu0
        %965 = vdwg.mxu0
        %v966 = vmul.f32 %v958, %v785
        %v967 = vmul.f32 %v963, %v786
        %v968 = vadd.f32 %v883, %v966
        %v969 = vadd.f32 %v884, %v967
        %v971 = vsel %vm797, %v881, 0
        %v974 = vsel %vm797, %v882, 0
        %v977 = vsel %vm797, %v968, 0
        %v980 = vsel %vm797, %v969, 0
        %982 = vmatprep.subr.mxu0 0.0
        %983 = vmatpush1.xpose.msra.mxu0 0.0
        %984 = vmatprep.subr.mxu0 0.0
        %985 = vmatpush1.xpose.msra.mxu0 0.0
        %986 = vmatprep.subr.mxu0 0.0
        %987 = vmatpush1.xpose.msra.mxu0 0.0
        %988 = vmatprep.subr.mxu0 0.0
        %989 = vmatpush1.xpose.msra.mxu0 0.0
        %990 = vmatprep.subr.mxu0 0.0
        %991 = vmatpush1.xpose.msra.mxu0 0.0
        %992 = vmatprep.subr.mxu0 0.0
        %993 = vmatpush1.xpose.msra.mxu0 0.0
        %994 = vmatprep.subr.mxu0 0.0
        %995 = vmatpush1.xpose.msra.mxu0 0.0
        %996 = vmatprep.subr.mxu0 0.0
        %997 = vmatpush1.xpose.msra.mxu0 0.0
        %998 = vmatprep.subr.mxu0 0.0
        %999 = vmatpush1.xpose.msra.mxu0 0.0
        %1000 = vmatprep.subr.mxu0 0.0
        %1001 = vmatpush1.xpose.msra.mxu0 0.0
        %1002 = vmatprep.subr.mxu0 0.0
        %1003 = vmatpush1.xpose.msra.mxu0 0.0
        %1004 = vmatprep.subr.mxu0 0.0
        %1005 = vmatpush1.xpose.msra.mxu0 0.0
        %1006 = vmatprep.subr.mxu0 0.0
        %1007 = vmatpush1.xpose.msra.mxu0 0.0
        %1008 = vmatprep.subr.mxu0 0.0
        %1009 = vmatpush1.xpose.msra.mxu0 0.0
        %1010 = vmatprep.subr.mxu0 0.0
        %1011 = vmatpush1.xpose.msra.mxu0 %v980
        %1012 = vmatprep.subr.mxu0 0.0
        %1013 = vmatpush1.xpose.msra.mxu0 %v977
        %1014 = vmatprep.subr.mxu0 0.0
        %1015 = vmatpush2.xpose.msra.mxu0 0.0
        %1016 = vmatprep.subr.mxu0 0.0
        %1017 = vmatpush2.xpose.msra.mxu0 0.0
        %1018 = vmatprep.subr.mxu0 0.0
        %1019 = vmatpush2.xpose.msra.mxu0 0.0
        %1020 = vmatprep.subr.mxu0 0.0
        %1021 = vmatpush2.xpose.msra.mxu0 0.0
        %1022 = vmatprep.subr.mxu0 0.0
        %1023 = vmatpush2.xpose.msra.mxu0 0.0
        %1024 = vmatprep.subr.mxu0 0.0
        %1025 = vmatpush2.xpose.msra.mxu0 0.0
        %1026 = vmatprep.subr.mxu0 0.0
        %1027 = vmatpush2.xpose.msra.mxu0 0.0
        %1028 = vmatprep.subr.mxu0 0.0
        %1029 = vmatpush2.xpose.msra.mxu0 0.0
        %1030 = vmatprep.subr.mxu0 0.0
        %1031 = vmatpush2.xpose.msra.mxu0 0.0
        %1032 = vmatprep.subr.mxu0 0.0
        %1033 = vmatpush2.xpose.msra.mxu0 0.0
        %1034 = vmatprep.subr.mxu0 0.0
        %1035 = vmatpush2.xpose.msra.mxu0 0.0
        %1036 = vmatprep.subr.mxu0 0.0
        %1037 = vmatpush2.xpose.msra.mxu0 0.0
        %1038 = vmatprep.subr.mxu0 0.0
        %1039 = vmatpush2.xpose.msra.mxu0 0.0
        %1040 = vmatprep.subr.mxu0 0.0
        %1041 = vmatpush2.xpose.msra.mxu0 0.0
        %1042 = vmatprep.subr.mxu0 0.0
        %1043 = vmatpush2.xpose.msra.mxu0 0.0
        %1044 = vmatprep.subr.mxu0 0.0
        %1045 = vmatpush2.xpose.msra.mxu0 0.0
        %1046 = vmatprep.mubr.f32.mxu0 0.0
        %1047 = vmatmul.mubr.f32.gmra.mxu0 %v971
        %v1048 = vpop.f32.mrf.mxu0
        %v1049 = vadd.f32 0.0, %v1048
        %v1050 = vpop.f32.mrf.mxu0
        %1051 = vmatprep.mubr.f32.mxu0 0.0
        %1052 = vmatmul.mubr.f32.gmra.mxu0 %v974
        %v1053 = vpop.f32.mrf.mxu0
        %v1054 = vadd.f32 0.0, %v1053
        %v1055 = vpop.f32.mrf.mxu0
        %1056 = vdwg.mxu0
        %vm1057 = vcmask 130048
        %v1058 = vsel %vm1057, %v1049, -inf
        %1059 = vmax.xlane.f32.xlu0 %v1058
        %v1060 = vpop.xlane.xlu0 %1059
        %v1061 = vsel %vm1057, %v1054, -inf
        %1062 = vmax.xlane.f32.xlu0 %v1061
        %v1063 = vpop.xlane.xlu0 %1062
        %v1064 = vsub.f32 %v1049, %v1060
        %v1065 = vsub.f32 %v1054, %v1063
        %v1066 = vmul.f32 %v1064, 1.442695
        %v1067 = vpow.pop %v1066
        %v1068 = vmul.f32 %v1065, 1.442695
        %v1069 = vpow.pop %v1068
        %v1070 = vsel %vm1057, %v1067, 0.0
        %1071 = vadd.xlane.f32.xlu0 %v1070
        %v1072 = vpop.xlane.xlu0 %1071
        %v1073 = vsel %vm1057, %v1069, 0.0
        %1074 = vadd.xlane.f32.xlu0 %v1073
        %v1075 = vpop.xlane.xlu0 %1074
        %v1076 = vrcp.pop %v1072
        %v1077 = vrcp.pop %v1075
        %v1078 = vmul.f32 %v1067, %v1076
        %v1079 = vmul.f32 %v1069, %v1077
        %v1081 = vsel %vm1057, %v1078, 0
        %v1084 = vsel %vm1057, %v1079, 0
        %1086 = vmatprep.subr.mxu0 0.0
        %1087 = vmatpush1.msra.mxu0 0.0
        %1088 = vmatprep.subr.mxu0 0.0
        %1089 = vmatpush1.msra.mxu0 0.0
        %1090 = vmatprep.subr.mxu0 0.0
        %1091 = vmatpush1.msra.mxu0 0.0
        %1092 = vmatprep.subr.mxu0 0.0
        %1093 = vmatpush1.msra.mxu0 0.0
        %1094 = vmatprep.subr.mxu0 0.0
        %1095 = vmatpush1.msra.mxu0 0.0
        %1096 = vmatprep.subr.mxu0 0.0
        %1097 = vmatpush1.msra.mxu0 0.0
        %1098 = vmatprep.subr.mxu0 0.0
        %1099 = vmatpush1.msra.mxu0 0.0
        %1100 = vmatprep.subr.mxu0 0.0
        %1101 = vmatpush1.msra.mxu0 0.0
        %1102 = vmatprep.subr.mxu0 0.0
        %1103 = vmatpush1.msra.mxu0 0.0
        %1104 = vmatprep.subr.mxu0 0.0
        %1105 = vmatpush1.msra.mxu0 0.0
        %1106 = vmatprep.subr.mxu0 0.0
        %1107 = vmatpush1.msra.mxu0 0.0
        %1108 = vmatprep.subr.mxu0 0.0
        %1109 = vmatpush1.msra.mxu0 0.0
        %1110 = vmatprep.subr.mxu0 0.0
        %1111 = vmatpush1.msra.mxu0 0.0
        %1112 = vmatprep.subr.mxu0 0.0
        %1113 = vmatpush1.msra.mxu0 0.0
        %1114 = vmatprep.subr.mxu0 0.0
        %1115 = vmatpush1.msra.mxu0 %v782
        %1116 = vmatprep.subr.mxu0 0.0
        %1117 = vmatpush1.msra.mxu0 %v777
        %1118 = vmatprep.subr.mxu0 0.0
        %1119 = vmatpush2.msra.mxu0 0.0
        %1120 = vmatprep.subr.mxu0 0.0
        %1121 = vmatpush2.msra.mxu0 0.0
        %1122 = vmatprep.subr.mxu0 0.0
        %1123 = vmatpush2.msra.mxu0 0.0
        %1124 = vmatprep.subr.mxu0 0.0
        %1125 = vmatpush2.msra.mxu0 0.0
        %1126 = vmatprep.subr.mxu0 0.0
        %1127 = vmatpush2.msra.mxu0 0.0
        %1128 = vmatprep.subr.mxu0 0.0
        %1129 = vmatpush2.msra.mxu0 0.0
        %1130 = vmatprep.subr.mxu0 0.0
        %1131 = vmatpush2.msra.mxu0 0.0
        %1132 = vmatprep.subr.mxu0 0.0
        %1133 = vmatpush2.msra.mxu0 0.0
        %1134 = vmatprep.subr.mxu0 0.0
        %1135 = vmatpush2.msra.mxu0 0.0
        %1136 = vmatprep.subr.mxu0 0.0
        %1137 = vmatpush2.msra.mxu0 0.0
        %1138 = vmatprep.subr.mxu0 0.0
        %1139 = vmatpush2.msra.mxu0 0.0
        %1140 = vmatprep.subr.mxu0 0.0
        %1141 = vmatpush2.msra.mxu0 0.0
        %1142 = vmatprep.subr.mxu0 0.0
        %1143 = vmatpush2.msra.mxu0 0.0
        %1144 = vmatprep.subr.mxu0 0.0
        %1145 = vmatpush2.msra.mxu0 0.0
        %1146 = vmatprep.subr.mxu0 0.0
        %1147 = vmatpush2.msra.mxu0 0.0
        %1148 = vmatprep.subr.mxu0 0.0
        %1149 = vmatpush2.msra.mxu0 0.0
        %1150 = vmatprep.mubr.f32.mxu0 0.0
        %1151 = vmatmul.mubr.f32.gmra.mxu0 %v1081
        %v1152 = vpop.f32.mrf.mxu0
        %v1153 = vadd.f32 0.0, %v1152
        %v1154 = vpop.f32.mrf.mxu0
        %1155 = vmatprep.mubr.f32.mxu0 0.0
        %1156 = vmatmul.mubr.f32.gmra.mxu0 %v1084
        %v1157 = vpop.f32.mrf.mxu0
        %v1158 = vadd.f32 0.0, %v1157
        %v1159 = vpop.f32.mrf.mxu0
        %1160 = vdwg.mxu0
        %v1161 = vld [vmem:[%s487] sm:$0xff]
        %v1162 = vld [vmem:[%s487 + $0x8] sm:$0xff]
        %v1163 = vld [vmem:[%s487 + $0x10] sm:$0xff]
        %v1164 = vld [vmem:[%s487 + $0x18] sm:$0xff]
        %v1166 = vsel %vm797, %v1153, 0
        %v1169 = vsel %vm797, %v1158, 0
        %1171 = vmatprep.subr.mxu0 0.0
        %1172 = vmatpush1.msra.mxu0 0.0
        %1173 = vmatprep.subr.mxu0 0.0
        %1174 = vmatpush1.msra.mxu0 0.0
        %1175 = vmatprep.subr.mxu0 0.0
        %1176 = vmatpush1.msra.mxu0 0.0
        %1177 = vmatprep.subr.mxu0 0.0
        %1178 = vmatpush1.msra.mxu0 0.0
        %1179 = vmatprep.subr.mxu0 0.0
        %1180 = vmatpush1.msra.mxu0 0.0
        %1181 = vmatprep.subr.mxu0 0.0
        %1182 = vmatpush1.msra.mxu0 0.0
        %1183 = vmatprep.subr.mxu0 0.0
        %1184 = vmatpush1.msra.mxu0 0.0
        %1185 = vmatprep.subr.mxu0 0.0
        %1186 = vmatpush1.msra.mxu0 0.0
        %1187 = vmatprep.subr.mxu0 0.0
        %1188 = vmatpush1.msra.mxu0 0.0
        %1189 = vmatprep.subr.mxu0 0.0
        %1190 = vmatpush1.msra.mxu0 0.0
        %1191 = vmatprep.subr.mxu0 0.0
        %1192 = vmatpush1.msra.mxu0 0.0
        %1193 = vmatprep.subr.mxu0 0.0
        %1194 = vmatpush1.msra.mxu0 0.0
        %1195 = vmatprep.subr.mxu0 0.0
        %1196 = vmatpush1.msra.mxu0 %v1164
        %1197 = vmatprep.subr.mxu0 0.0
        %1198 = vmatpush1.msra.mxu0 %v1163
        %1199 = vmatprep.subr.mxu0 0.0
        %1200 = vmatpush1.msra.mxu0 %v1162
        %1201 = vmatprep.subr.mxu0 0.0
        %1202 = vmatpush1.msra.mxu0 %v1161
        %1203 = vmatprep.subr.mxu0 0.0
        %1204 = vmatpush2.msra.mxu0 0.0
        %1205 = vmatprep.subr.mxu0 0.0
        %1206 = vmatpush2.msra.mxu0 0.0
        %1207 = vmatprep.subr.mxu0 0.0
        %1208 = vmatpush2.msra.mxu0 0.0
        %1209 = vmatprep.subr.mxu0 0.0
        %1210 = vmatpush2.msra.mxu0 0.0
        %1211 = vmatprep.subr.mxu0 0.0
        %1212 = vmatpush2.msra.mxu0 0.0
        %1213 = vmatprep.subr.mxu0 0.0
        %1214 = vmatpush2.msra.mxu0 0.0
        %1215 = vmatprep.subr.mxu0 0.0
        %1216 = vmatpush2.msra.mxu0 0.0
        %1217 = vmatprep.subr.mxu0 0.0
        %1218 = vmatpush2.msra.mxu0 0.0
        %1219 = vmatprep.subr.mxu0 0.0
        %1220 = vmatpush2.msra.mxu0 0.0
        %1221 = vmatprep.subr.mxu0 0.0
        %1222 = vmatpush2.msra.mxu0 0.0
        %1223 = vmatprep.subr.mxu0 0.0
        %1224 = vmatpush2.msra.mxu0 0.0
        %1225 = vmatprep.subr.mxu0 0.0
        %1226 = vmatpush2.msra.mxu0 0.0
        %1227 = vmatprep.subr.mxu0 0.0
        %1228 = vmatpush2.msra.mxu0 0.0
        %1229 = vmatprep.subr.mxu0 0.0
        %1230 = vmatpush2.msra.mxu0 0.0
        %1231 = vmatprep.subr.mxu0 0.0
        %1232 = vmatpush2.msra.mxu0 0.0
        %1233 = vmatprep.subr.mxu0 0.0
        %1234 = vmatpush2.msra.mxu0 0.0
        %1235 = vmatprep.mubr.f32.mxu0 0.0
        %1236 = vmatmul.mubr.f32.gmra.mxu0 %v1166
        %v1237 = vpop.f32.mrf.mxu0
        %v1238 = vadd.f32 0.0, %v1237
        %v1239 = vpop.f32.mrf.mxu0
        %1240 = vmatprep.mubr.f32.mxu0 0.0
        %1241 = vmatmul.mubr.f32.gmra.mxu0 %v1169
        %v1242 = vpop.f32.mrf.mxu0
        %v1243 = vadd.f32 0.0, %v1242
        %v1244 = vpop.f32.mrf.mxu0
        %1245 = vdwg.mxu0
        %p1246 = scmp.eq.s32.totalorder %s38, 0
        // Predicated region
        $region85: #{tpu_custom_call.1} parent=51 // pred_check
          %p1247 = pneg %p1246
        $region86: #{tpu_custom_call.1} parent=51 // pred_check_branch
          %1249 = sbr.rel (%p1247) target = $region88
        $region87: #{tpu_custom_call.1} parent=51 // pred_region
          %1250 = vst [vmem:[#allocation2] sm:$0xff] 0.0
          %1251 = vst [vmem:[#allocation2 + $0x8] sm:$0xff] 0.0
        $region88: #{tpu_custom_call.1} parent=51 // pred_fallthru
          _
        %v1252 = vld [vmem:[#allocation2] sm:$0xff]
        %v1253 = vld [vmem:[#allocation2 + $0x8] sm:$0xff]
        %v1254 = vadd.f32 %v1252, %v1238
        %v1255 = vadd.f32 %v1253, %v1243
        %1256 = vst [vmem:[#allocation2] sm:$0xff] %v1254
        %1257 = vst [vmem:[#allocation2 + $0x8] sm:$0xff] %v1255
        %p1258 = scmp.eq.s32.totalorder %s38, 3
        // Predicated region
        $region89: #{tpu_custom_call.1} parent=51 // pred_check
          %p1259 = pneg %p1258
        $region90: #{tpu_custom_call.1} parent=51 // pred_check_branch
          %1261 = sbr.rel (%p1259) target = $region92
        $region91: #{tpu_custom_call.1} parent=51 // pred_region
          %v1262 = vld [vmem:[#allocation2] sm:$0xff]
          %v1263 = vld [vmem:[#allocation2 + $0x8] sm:$0xff]
          %1264 = vst [vmem:[%s539] sm:$0xff] %v1262
          %1265 = vst [vmem:[%s539 + $0x8] sm:$0xff] %v1263
        $region92: #{tpu_custom_call.1} parent=51 // pred_fallthru
          _
        %s1266 = sand.u32 %s250, 1
        %s1267 = scalar_lea.sflag [#allocation5], %s1266
        %s1268 = sand.u32 %s250, 1
        %s1269 = smul.addr %s1268, 16
        %s1270 = scalar_lea.vmem [#allocation17], %s1269
        // Predicated region
        $region93: #{tpu_custom_call.1} parent=51 // pred_check
          %p1271 = pneg %p260
        $region94: #{tpu_custom_call.1} parent=51 // pred_check_branch
          %1273 = sbr.rel (%p1271) target = $region96
        $region95: #{tpu_custom_call.1} parent=51 // pred_region
          %s1275 = ssub.s32 256, 256
          %1276 = vsyncadd %s1267, %s1275
          %s1277 = smul.addr %s37, 2
          %s1278 = smul.addr %s1277, 128
          %s1279 = scalar_lea.hbm %s8, %s1278
          %s1280 = sshll.u32 %s1270, 4
          %s1281 = int_to_ptr.vmem [resolvable:$true] %s1280
          %1286 = dma.vmem_to_hbm [thread:$0]  %s1281, 256, %s1279, %s1267, 128, 128, 8
        $region96: #{tpu_custom_call.1} parent=51 // pred_fallthru
          _
      $region52: #{tpu_custom_call.1} parent=5 // pred_fallthru
        _
      %p1287 = scmp.le.s32.totalorder 2, %s28
      // Predicated region
      $region97: #{tpu_custom_call.1} parent=5 // pred_check
        %p1288 = pneg %p1287
      $region98: #{tpu_custom_call.1} parent=5 // pred_check_branch
        %1290 = sbr.rel (%p1288) target = $region100
      $region99: #{tpu_custom_call.1} parent=5 // pred_region
        %s1291 = ssub.s32 %s28, 2
        // Predicated region
        $region101: #{tpu_custom_call.1} parent=99 // pred_check
          %p1292 = pneg %p266
        $region102: #{tpu_custom_call.1} parent=99 // pred_check_branch
          %1294 = sbr.rel (%p1292) target = $region104
        $region103: #{tpu_custom_call.1} parent=99 // pred_region
          %s1295 = sand.u32 %s251, 1
          %s1296 = scalar_lea.sflag [#allocation5], %s1295
          %s1297 = sand.u32 %s251, 1
          %s1298 = smul.addr %s1297, 16
          %s1299 = scalar_lea.vmem [#allocation17], %s1298
          %1300 = dma.done %s1296, 256
        $region104: #{tpu_custom_call.1} parent=99 // pred_fallthru
          _
      $region100: #{tpu_custom_call.1} parent=5 // pred_fallthru
        _
    $region6: #{tpu_custom_call.1} parent=1 // loop_footer
      %s32 = sadd.s32 1, %s28
    $region7: #{tpu_custom_call.1} parent=1 // loop_footer_branch
      %27 = sbr.rel target = $region3
    $region8: #{tpu_custom_call.1} parent=1 // loop_exit
      _
    %1301 = vsyncpa [#allocation4], 1
    %s1302 = scalar_lea.sflag [#allocation4], 1
    %1303 = vsyncpa %s1302, 1
    %1304 = vsyncpa [#allocation7], 1
    %1305 = vsyncpa [#allocation10], 1
    %s1306 = scalar_lea.sflag [#allocation10], 1
    %1307 = vsyncpa %s1306, 1
    %1308 = vsyncpa [#allocation13], 1
    %s1309 = scalar_lea.sflag [#allocation13], 1
    %1310 = vsyncpa %s1309, 1
    %1311 = vsyncpa [#allocation16], 1
    %s1312 = scalar_lea.sflag [#allocation16], 1
    %1313 = vsyncpa %s1312, 1
    %1314 = vsyncpa [#allocation5], 1
    %s1315 = scalar_lea.sflag [#allocation5], 1
    %1316 = vsyncpa %s1315, 1

</llo_original>
